<compile_context>
chip_gen: v7x
topology: tpu7x:2x2x1
jax: 0.10.0
libtpu: 0.0.40
codegen_flags: <defaults>
</compile_context>

<pallas_src>
import functools
import math

import jax
import jax.numpy as jnp
from jax import lax
from jax.experimental import pallas as pl
from jax.experimental.pallas import tpu as pltpu

# eval-mode BatchNorm1d with default params (gamma=1, beta=0, mean=0, var=1)
BN_SCALE = 1.0 / math.sqrt(1.0 + 1e-5)


def _bf16(x):
    return x.astype(jnp.bfloat16)


# ---------------------------------------------------------------------------
# Fused kernel: node/edge projection + one-hot build (at layer 0) + one full
# GPS layer per grid step.  out_ref has a constant block index, so it stays
# resident in VMEM across layer iterations and carries the node-feature state.
# ---------------------------------------------------------------------------
def _gps_fused_kernel(
    x_ref, src_ref, tgt_ref, eattr_ref,
    node_w_ref, node_b_ref, edge_w_ref, edge_b_ref,
    gw1_ref, gb1_ref, gw2_ref, gb2_ref,
    wqkv_ref, bqkv_ref, bo_ref,
    fw1_ref, fb1_ref, fw2_ref, fb2_ref,
    out_ref,
    oh_src_ref, oh_tgt_ref, e_feat_ref,
    *, heads, gine_eps):
    n, c = out_ref.shape
    n_edges = src_ref.shape[0]
    dh = c // heads
    layer = pl.program_id(0)

    # ---- layer 0 only: node projection + layer-invariant precompute --------
    @pl.when(layer == 0)
    def _():
        # h seeded into the VMEM-resident output block
        out_ref[...] = (
            jnp.dot(_bf16(x_ref[...]), node_w_ref[...],
                    preferred_element_type=jnp.float32) + node_b_ref[...])
        # edge projection: Linear(1, C) == one VPU broadcast FMA
        e_feat_ref[...] = eattr_ref[...] * edge_w_ref[...] + edge_b_ref[...]
        # gather/scatter one-hots built in-kernel from tiny int32 index
        # vectors (exact in f32; nothing E x N is read from HBM) -- hoisted
        # to scratch so the O(E*N) VPU build is not redone every layer.
        oh_src_ref[...] = (lax.broadcasted_iota(jnp.int32, (n_edges, n), 1)
                           == src_ref[...]).astype(jnp.float32)       # [E, N]
        oh_tgt_ref[...] = (lax.broadcasted_iota(jnp.int32, (n, n_edges), 0)
                           == tgt_ref[...]).astype(jnp.float32)       # [N, E]

    h = out_ref[...]                                               # [N, C] f32

    # ---- GINEConv (local message passing) ----------------------------------
    x_src = jnp.dot(oh_src_ref[...], h,
                    preferred_element_type=jnp.float32)            # [E, C]
    msg = jnp.maximum(x_src + e_feat_ref[...], 0.0)
    aggr = jnp.dot(oh_tgt_ref[...], msg,
                   preferred_element_type=jnp.float32)             # [N, C]

    z = (1.0 + gine_eps) * h + aggr
    z = jnp.maximum(
        jnp.dot(_bf16(z), gw1_ref[...],
                preferred_element_type=jnp.float32) + gb1_ref[...], 0.0)
    z = (jnp.dot(_bf16(z), gw2_ref[...],
                 preferred_element_type=jnp.float32) + gb2_ref[...])
    h_local = (z + h) * BN_SCALE                 # dropout = id, BN1 eval mode

    # ---- MultiheadAttention (global) ----------------------------------------
    # One fused batched projection per layer: per-head weight [C, 2*dh + C]
    # holds [Wq*1/sqrt(dh) | Wk | Wv @ Wo] so no separate out-projection dot.
    hb = jnp.broadcast_to(_bf16(h), (heads, n, c))                 # [H, N, C]
    qkv = lax.dot_general(hb, wqkv_ref[...], (((2,), (1,)), ((0,), (0,))),
                          preferred_element_type=jnp.float32) + bqkv_ref[...]
    q = qkv[:, :, 0:dh]                                            # [H, N, dh]
    k = qkv[:, :, dh:2 * dh]                                       # [H, N, dh]
    vo = qkv[:, :, 2 * dh:]                                        # [H, N, C]

    s = lax.dot_general(_bf16(q), _bf16(k), (((2,), (2,)), ((0,), (0,))),
                        preferred_element_type=jnp.float32)        # [H, N, N]
    s = s - jnp.max(s, axis=-1, keepdims=True)
    p = jnp.exp(s)
    p = p * pl.reciprocal(jnp.sum(p, axis=-1, keepdims=True), approx=True)
    # attn = sum_h p_h @ (v_h @ Wo_h)  (+ bo)  == standard MHA output
    attn = lax.dot_general(_bf16(p), _bf16(vo), (((2,), (1,)), ((0,), (0,))),
                           preferred_element_type=jnp.float32)     # [H, N, C]
    attn = jnp.sum(attn, axis=0) + bo_ref[...]                     # [N, C]
    h_attn = (attn + h) * BN_SCALE               # dropout = id, BN2 eval mode

    # ---- GPS feed-forward ---------------------------------------------------
    s_sum = h_local + h_attn
    y = jnp.maximum(
        jnp.dot(_bf16(s_sum), fw1_ref[...],
                preferred_element_type=jnp.float32) + fb1_ref[...], 0.0)
    y = (jnp.dot(_bf16(y), fw2_ref[...],
                 preferred_element_type=jnp.float32) + fb2_ref[...])
    out_ref[...] = (s_sum + y) * BN_SCALE        # BN3 eval mode


# ----------------------------------------------------- VMEM budget helper ---
def _ceil_to(v, m):
    return -(-v // m) * m


def _block_bytes(shape, dtype):
    """Tile-padded VMEM footprint of one buffer of `shape`/`dtype`."""
    itemsize = jnp.dtype(dtype).itemsize
    dims = [int(d) for d in shape] or [1]
    if len(dims) == 1:
        dims = [1] + dims
    sublane = 8 * max(1, 4 // itemsize)         # 8 for f32/i32, 16 for bf16
    dims[-1] = _ceil_to(dims[-1], 128)
    dims[-2] = _ceil_to(dims[-2], sublane)
    total = 1
    for d in dims:
        total *= d
    return total * itemsize


# -------------------------------------------------------------- forward ----
def graphgps_forward(params, x, edge_index, edge_attr, heads):
    n, din = x.shape
    c = params["node_b"].shape[-1]
    n_edges = edge_index.shape[1]
    n_layers = params["gw1"].shape[0]
    assert c % heads == 0, "heads must divide dout"

    src_idx = edge_index[0].reshape(n_edges, 1).astype(jnp.int32)   # [E, 1]
    tgt_idx = edge_index[1].reshape(1, n_edges).astype(jnp.int32)   # [1, E]
    eattr = edge_attr.reshape(n_edges, 1).astype(jnp.float32)       # [E, 1]

    def full(shape):
        nd = len(shape)
        return pl.BlockSpec(shape, lambda l, _nd=nd: (0,) * _nd)

    def per_layer(arr):
        nd = arr.ndim
        return pl.BlockSpec((None,) + tuple(arr.shape[1:]),
                            lambda l, _nd=nd: (l,) + (0,) * (_nd - 1))

    const_inputs = [                       # constant index maps: DMA'd once
        (x, (n, din)),
        (src_idx, (n_edges, 1)),
        (tgt_idx, (1, n_edges)),
        (eattr, (n_edges, 1)),
        (params["node_w"], (din, c)),
        (params["node_b"], (1, c)),
        (params["edge_w"], (1, c)),
        (params["edge_b"], (1, c)),
    ]
    layer_inputs = [params[k] for k in
                    ("gw1", "gb1", "gw2", "gb2", "wqkv", "bqkv", "bo",
                     "fw1", "fb1", "fw2", "fb2")]

    in_specs = ([full(shape) for _, shape in const_inputs]
                + [per_layer(a) for a in layer_inputs])
    operands = [a for a, _ in const_inputs] + layer_inputs

    scratch_shapes = [
        pltpu.VMEM((n_edges, n), jnp.float32),   # oh_src
        pltpu.VMEM((n, n_edges), jnp.float32),   # oh_tgt
        pltpu.VMEM((n_edges, c), jnp.float32),   # projected edge features
    ]

    # VMEM limit derived from actual footprint (double-buffered inputs/output
    # + scratch) instead of a blanket 48 MiB request -> headroom on v7x.
    blk_bytes = 0
    for a, shape in const_inputs:
        blk_bytes += 2 * _block_bytes(shape, a.dtype)
    for a in layer_inputs:
        blk_bytes += 2 * _block_bytes(a.shape[1:], a.dtype)
    blk_bytes += 2 * _block_bytes((n, c), jnp.float32)              # output
    blk_bytes += _block_bytes((n_edges, n), jnp.float32)
    blk_bytes += _block_bytes((n, n_edges), jnp.float32)
    blk_bytes += _block_bytes((n_edges, c), jnp.float32)
    vmem_limit = int(min(max(4 << 20, 2 * blk_bytes + (1 << 20)), 32 << 20))

    kernel = functools.partial(_gps_fused_kernel, heads=heads, gine_eps=0.0)

    return pl.pallas_call(
        kernel,
        out_shape=jax.ShapeDtypeStruct((n, c), jnp.float32),
        grid=(n_layers,),
        in_specs=in_specs,
        out_specs=pl.BlockSpec((n, c), lambda l: (0, 0)),
        scratch_shapes=scratch_shapes,
        compiler_params=pltpu.CompilerParams(
            dimension_semantics=("arbitrary",),   # layers carry h sequentially
            vmem_limit_bytes=vmem_limit),
    )(*operands)


# ----------------------------------------------------------- parameters ----
def _init_linear(key, fan_in, fan_out):
    # PyTorch nn.Linear default init: U(-1/sqrt(fan_in), 1/sqrt(fan_in)).
    kw, kb = jax.random.split(key)
    bound = 1.0 / math.sqrt(fan_in)
    w = jax.random.uniform(kw, (fan_in, fan_out), jnp.float32, -bound, bound)
    b = jax.random.uniform(kb, (1, fan_out), jnp.float32, -bound, bound)
    return w, b


def init_params(key, din, dout, heads, n_layers):
    assert dout % heads == 0, "heads must divide dout"
    dh = dout // heads
    scale = 1.0 / math.sqrt(dh)
    keys = jax.random.split(key, 2 + n_layers)

    params = {}
    node_w, node_b = _init_linear(keys[0], din, dout)
    edge_w, edge_b = _init_linear(keys[1], 1, dout)
    params["node_w"], params["node_b"] = _bf16(node_w), node_b
    params["edge_w"], params["edge_b"] = edge_w, edge_b   # VPU path stays f32

    names = ("gw1", "gb1", "gw2", "gb2", "wqkv", "bqkv", "bo",
             "fw1", "fb1", "fw2", "fb2")
    acc = {name: [] for name in names}

    for li in range(n_layers):
        lk = jax.random.split(keys[2 + li], 6)
        gw1, gb1 = _init_linear(lk[0], dout, dout)          # GINE mlp lin1
        gw2, gb2 = _init_linear(lk[1], dout, dout)          # GINE mlp lin2
        w_in, b_in = _init_linear(lk[2], dout, 3 * dout)    # MHA in_proj (x@W)
        wo, bo = _init_linear(lk[3], dout, dout)            # MHA out_proj
        fw1, fb1 = _init_linear(lk[4], dout, 2 * dout)      # GPS mlp lin1
        fw2, fb2 = _init_linear(lk[5], 2 * dout, dout)      # GPS mlp lin2

        # Fused per-head projection [Wq*s | Wk | Wv @ Wo]  (out-proj folded).
        wqkv_h, bqkv_h = [], []
        for hd in range(heads):
            sl = slice(hd * dh, (hd + 1) * dh)
            wq_h = w_in[:, 0 * dout:1 * dout][:, sl] * scale
            wk_h = w_in[:, 1 * dout:2 * dout][:, sl]
            wv_h = w_in[:, 2 * dout:3 * dout][:, sl]
            bq_h = b_in[:, 0 * dout:1 * dout][:, sl] * scale
            bk_h = b_in[:, 1 * dout:2 * dout][:, sl]
            bv_h = b_in[:, 2 * dout:3 * dout][:, sl]
            wo_h = wo[sl, :]                                  # [dh, C]
            wvo_h = wv_h @ wo_h                               # [C, C]
            bvo_h = bv_h @ wo_h                               # [1, C]
            wqkv_h.append(jnp.concatenate([wq_h, wk_h, wvo_h], axis=1))
            bqkv_h.append(jnp.concatenate([bq_h, bk_h, bvo_h], axis=1))
        wqkv = jnp.stack(wqkv_h, axis=0)                      # [H, C, 2dh+C]
        bqkv = jnp.stack(bqkv_h, axis=0)                      # [H, 1, 2dh+C]

        vals = dict(gw1=gw1, gb1=gb1, gw2=gw2, gb2=gb2,
                    wqkv=wqkv, bqkv=bqkv, bo=bo,
                    fw1=fw1, fb1=fb1, fw2=fw2, fb2=fb2)
        for name in names:
            acc[name].append(vals[name])

    bf16_weights = {"gw1", "gw2", "wqkv", "fw1", "fw2"}
    for name in names:
        stacked = jnp.stack(acc[name], axis=0)
        params[name] = _bf16(stacked) if name in bf16_weights else stacked
    return params


# ----------------------------------------------------------------- main ----
if __name__ == "__main__":
    DIN, DOUT, HEADS, N_LAYERS = 6, 32, 4, 2
    N_NODES = 8

    key = jax.random.PRNGKey(0)
    kx, ke, kp = jax.random.split(key, 3)

    x = jax.random.normal(kx, (N_NODES, DIN), dtype=jnp.float32)
    # bidirectional ring graph: 16 directed edges
    src = jnp.concatenate([jnp.arange(N_NODES), jnp.arange(N_NODES)])
    tgt = jnp.concatenate([(jnp.arange(N_NODES) + 1) % N_NODES,
                           (jnp.arange(N_NODES) - 1) % N_NODES])
    edge_index = jnp.stack([src, tgt]).astype(jnp.int32)            # [2, 16]
    edge_attr = jax.random.normal(ke, (edge_index.shape[1],), dtype=jnp.float32)

    params = init_params(kp, DIN, DOUT, HEADS, N_LAYERS)

    fwd = jax.jit(functools.partial(graphgps_forward, heads=HEADS))
    out = jax.block_until_ready(fwd(params, x, edge_index, edge_attr))
    assert out.shape == (N_NODES, DOUT)
    assert bool(jnp.all(jnp.isfinite(out)))
    print("KERNEL_OK")
</pallas_src>

<mosaic_0001>
module attributes {stable_mosaic.version = 11 : i64} {
  func.func @_gps_fused_kernel(%arg0: i32, %arg1: memref<8x6xf32, #tpu.memory_space<vmem>>, %arg2: memref<16x1xi32, #tpu.memory_space<vmem>>, %arg3: memref<1x16xi32, #tpu.memory_space<vmem>>, %arg4: memref<16x1xf32, #tpu.memory_space<vmem>>, %arg5: memref<6x32xbf16, #tpu.memory_space<vmem>>, %arg6: memref<1x32xf32, #tpu.memory_space<vmem>>, %arg7: memref<1x32xf32, #tpu.memory_space<vmem>>, %arg8: memref<1x32xf32, #tpu.memory_space<vmem>>, %arg9: memref<1x32x32xbf16, #tpu.memory_space<vmem>>, %arg10: memref<1x1x32xf32, #tpu.memory_space<vmem>>, %arg11: memref<1x32x32xbf16, #tpu.memory_space<vmem>>, %arg12: memref<1x1x32xf32, #tpu.memory_space<vmem>>, %arg13: memref<1x4x32x48xbf16, #tpu.memory_space<vmem>>, %arg14: memref<1x4x1x48xf32, #tpu.memory_space<vmem>>, %arg15: memref<1x1x32xf32, #tpu.memory_space<vmem>>, %arg16: memref<1x32x64xbf16, #tpu.memory_space<vmem>>, %arg17: memref<1x1x64xf32, #tpu.memory_space<vmem>>, %arg18: memref<1x64x32xbf16, #tpu.memory_space<vmem>>, %arg19: memref<1x1x32xf32, #tpu.memory_space<vmem>>, %arg20: memref<8x32xf32, #tpu.memory_space<vmem>>, %arg21: memref<16x8xf32, #tpu.memory_space<vmem>>, %arg22: memref<8x16xf32, #tpu.memory_space<vmem>>, %arg23: memref<16x32xf32, #tpu.memory_space<vmem>>) attributes {dimension_semantics = [#tpu.dimension_semantics<arbitrary>], iteration_bounds = array<i64: 2>, scalar_prefetch = 0 : i64, scratch_operands = 3 : i64, tpu.core_type = #tpu.core_type<tc>, window_params = [{pipeline_mode = #tpu.pipeline_mode<synchronous>, transform_indices = @transform_0, window_bounds = array<i64: 8, 6>}, {pipeline_mode = #tpu.pipeline_mode<synchronous>, transform_indices = @transform_1, window_bounds = array<i64: 16, 1>}, {pipeline_mode = #tpu.pipeline_mode<synchronous>, transform_indices = @transform_2, window_bounds = array<i64: 1, 16>}, {pipeline_mode = #tpu.pipeline_mode<synchronous>, transform_indices = @transform_3, window_bounds = array<i64: 16, 1>}, {pipeline_mode = #tpu.pipeline_mode<synchronous>, transform_indices = @transform_4, window_bounds = array<i64: 6, 32>}, {pipeline_mode = #tpu.pipeline_mode<synchronous>, transform_indices = @transform_5, window_bounds = array<i64: 1, 32>}, {pipeline_mode = #tpu.pipeline_mode<synchronous>, transform_indices = @transform_6, window_bounds = array<i64: 1, 32>}, {pipeline_mode = #tpu.pipeline_mode<synchronous>, transform_indices = @transform_7, window_bounds = array<i64: 1, 32>}, {transform_indices = @transform_8, window_bounds = array<i64: 1, 32, 32>}, {transform_indices = @transform_9, window_bounds = array<i64: 1, 1, 32>}, {transform_indices = @transform_10, window_bounds = array<i64: 1, 32, 32>}, {transform_indices = @transform_11, window_bounds = array<i64: 1, 1, 32>}, {transform_indices = @transform_12, window_bounds = array<i64: 1, 4, 32, 48>}, {transform_indices = @transform_13, window_bounds = array<i64: 1, 4, 1, 48>}, {transform_indices = @transform_14, window_bounds = array<i64: 1, 1, 32>}, {transform_indices = @transform_15, window_bounds = array<i64: 1, 32, 64>}, {transform_indices = @transform_16, window_bounds = array<i64: 1, 1, 64>}, {transform_indices = @transform_17, window_bounds = array<i64: 1, 64, 32>}, {transform_indices = @transform_18, window_bounds = array<i64: 1, 1, 32>}, {pipeline_mode = #tpu.pipeline_mode<synchronous>, transform_indices = @transform_19, window_bounds = array<i64: 8, 32>}]} {
    %c0_i32 = arith.constant 0 : i32
    %0 = arith.cmpi eq, %arg0, %c0_i32 : i32
    %1 = arith.extui %0 : i1 to i32
    %c0_i32_0 = arith.constant 0 : i32
    %2 = arith.cmpi ne, %1, %c0_i32_0 : i32
    scf.if %2 {
      %c0_63 = arith.constant 0 : index
      %c0_64 = arith.constant 0 : index
      %96 = vector.load %arg1[%c0_63, %c0_64] : memref<8x6xf32, #tpu.memory_space<vmem>>, vector<8x6xf32>
      %97 = arith.truncf %96 : vector<8x6xf32> to vector<8x6xbf16>
      %c0_65 = arith.constant 0 : index
      %c0_66 = arith.constant 0 : index
      %98 = vector.load %arg5[%c0_65, %c0_66] : memref<6x32xbf16, #tpu.memory_space<vmem>>, vector<6x32xbf16>
      %cst_67 = arith.constant dense<0.000000e+00> : vector<8x32xf32>
      %99 = tpu.matmul %97, %98, %cst_67 {dimension_numbers = #tpu.dot_dimension_numbers<[1], [0], [0], [1], [0, 0, 1, 1], [], []>} : vector<8x6xbf16>, vector<6x32xbf16>, vector<8x32xf32> -> vector<8x32xf32>
      %c0_68 = arith.constant 0 : index
      %c0_69 = arith.constant 0 : index
      %100 = vector.load %arg6[%c0_68, %c0_69] : memref<1x32xf32, #tpu.memory_space<vmem>>, vector<1x32xf32>
      %101 = vector.broadcast %100 : vector<1x32xf32> to vector<8x32xf32>
      %102 = arith.addf %99, %101 : vector<8x32xf32>
      %c0_70 = arith.constant 0 : index
      %c0_71 = arith.constant 0 : index
      %103 = vector.load %arg20[%c0_70, %c0_71] : memref<8x32xf32, #tpu.memory_space<vmem>>, vector<8x32xf32>
      tpu.vector_store %arg20[%c0_70, %c0_71], %102 {strides = array<i32>} : memref<8x32xf32, #tpu.memory_space<vmem>>, vector<8x32xf32>,
      %c0_72 = arith.constant 0 : index
      %c0_73 = arith.constant 0 : index
      %104 = vector.load %arg4[%c0_72, %c0_73] : memref<16x1xf32, #tpu.memory_space<vmem>>, vector<16x1xf32>
      %c0_74 = arith.constant 0 : index
      %c0_75 = arith.constant 0 : index
      %105 = vector.load %arg7[%c0_74, %c0_75] : memref<1x32xf32, #tpu.memory_space<vmem>>, vector<1x32xf32>
      %106 = vector.broadcast %104 : vector<16x1xf32> to vector<16x32xf32>
      %107 = vector.broadcast %105 : vector<1x32xf32> to vector<16x32xf32>
      %108 = arith.mulf %106, %107 : vector<16x32xf32>
      %c0_76 = arith.constant 0 : index
      %c0_77 = arith.constant 0 : index
      %109 = vector.load %arg8[%c0_76, %c0_77] : memref<1x32xf32, #tpu.memory_space<vmem>>, vector<1x32xf32>
      %110 = vector.broadcast %109 : vector<1x32xf32> to vector<16x32xf32>
      %111 = arith.addf %108, %110 : vector<16x32xf32>
      %c0_78 = arith.constant 0 : index
      %c0_79 = arith.constant 0 : index
      %112 = vector.load %arg23[%c0_78, %c0_79] : memref<16x32xf32, #tpu.memory_space<vmem>>, vector<16x32xf32>
      tpu.vector_store %arg23[%c0_78, %c0_79], %111 {strides = array<i32>} : memref<16x32xf32, #tpu.memory_space<vmem>>, vector<16x32xf32>,
      %113 = tpu.iota {dimensions = array<i32: 1>} : vector<16x8xi32>
      %c0_80 = arith.constant 0 : index
      %c0_81 = arith.constant 0 : index
      %114 = vector.load %arg2[%c0_80, %c0_81] : memref<16x1xi32, #tpu.memory_space<vmem>>, vector<16x1xi32>
      %115 = vector.broadcast %114 : vector<16x1xi32> to vector<16x8xi32>
      %116 = arith.cmpi eq, %113, %115 : vector<16x8xi32>
      %117 = arith.extui %116 : vector<16x8xi1> to vector<16x8xi32>
      %118 = arith.sitofp %117 : vector<16x8xi32> to vector<16x8xf32>
      %c0_82 = arith.constant 0 : index
      %c0_83 = arith.constant 0 : index
      %119 = vector.load %arg21[%c0_82, %c0_83] : memref<16x8xf32, #tpu.memory_space<vmem>>, vector<16x8xf32>
      tpu.vector_store %arg21[%c0_82, %c0_83], %118 {strides = array<i32>} : memref<16x8xf32, #tpu.memory_space<vmem>>, vector<16x8xf32>,
      %120 = tpu.iota {dimensions = array<i32: 0>} : vector<8x16xi32>
      %c0_84 = arith.constant 0 : index
      %c0_85 = arith.constant 0 : index
      %121 = vector.load %arg3[%c0_84, %c0_85] : memref<1x16xi32, #tpu.memory_space<vmem>>, vector<1x16xi32>
      %122 = vector.broadcast %121 : vector<1x16xi32> to vector<8x16xi32>
      %123 = arith.cmpi eq, %120, %122 : vector<8x16xi32>
      %124 = arith.extui %123 : vector<8x16xi1> to vector<8x16xi32>
      %125 = arith.sitofp %124 : vector<8x16xi32> to vector<8x16xf32>
      %c0_86 = arith.constant 0 : index
      %c0_87 = arith.constant 0 : index
      %126 = vector.load %arg22[%c0_86, %c0_87] : memref<8x16xf32, #tpu.memory_space<vmem>>, vector<8x16xf32>
      tpu.vector_store %arg22[%c0_86, %c0_87], %125 {strides = array<i32>} : memref<8x16xf32, #tpu.memory_space<vmem>>, vector<8x16xf32>,
    } else {
    }
    %c0 = arith.constant 0 : index
    %c0_1 = arith.constant 0 : index
    %3 = vector.load %arg20[%c0, %c0_1] : memref<8x32xf32, #tpu.memory_space<vmem>>, vector<8x32xf32>
    %c0_2 = arith.constant 0 : index
    %c0_3 = arith.constant 0 : index
    %4 = vector.load %arg21[%c0_2, %c0_3] : memref<16x8xf32, #tpu.memory_space<vmem>>, vector<16x8xf32>
    %cst = arith.constant dense<0.000000e+00> : vector<16x32xf32>
    %5 = tpu.matmul %4, %3, %cst {dimension_numbers = #tpu.dot_dimension_numbers<[1], [0], [0], [1], [0, 0, 1, 1], [], []>} : vector<16x8xf32>, vector<8x32xf32>, vector<16x32xf32> -> vector<16x32xf32>
    %c0_4 = arith.constant 0 : index
    %c0_5 = arith.constant 0 : index
    %6 = vector.load %arg23[%c0_4, %c0_5] : memref<16x32xf32, #tpu.memory_space<vmem>>, vector<16x32xf32>
    %7 = arith.addf %5, %6 : vector<16x32xf32>
    %cst_6 = arith.constant 0.000000e+00 : f32
    %8 = vector.broadcast %cst_6 : f32 to vector<16x32xf32>
    %9 = arith.maximumf %7, %8 : vector<16x32xf32>
    %c0_7 = arith.constant 0 : index
    %c0_8 = arith.constant 0 : index
    %10 = vector.load %arg22[%c0_7, %c0_8] : memref<8x16xf32, #tpu.memory_space<vmem>>, vector<8x16xf32>
    %cst_9 = arith.constant dense<0.000000e+00> : vector<8x32xf32>
    %11 = tpu.matmul %10, %9, %cst_9 {dimension_numbers = #tpu.dot_dimension_numbers<[1], [0], [0], [1], [0, 0, 1, 1], [], []>} : vector<8x16xf32>, vector<16x32xf32>, vector<8x32xf32> -> vector<8x32xf32>
    %cst_10 = arith.constant 1.000000e+00 : f32
    %12 = vector.broadcast %cst_10 : f32 to vector<8x32xf32>
    %13 = arith.mulf %12, %3 : vector<8x32xf32>
    %14 = arith.addf %13, %11 : vector<8x32xf32>
    %15 = arith.truncf %14 : vector<8x32xf32> to vector<8x32xbf16>
    %c0_11 = arith.constant 0 : index
    %c0_12 = arith.constant 0 : index
    %c0_13 = arith.constant 0 : index
    %16 = vector.load %arg9[%c0_11, %c0_12, %c0_13] : memref<1x32x32xbf16, #tpu.memory_space<vmem>>, vector<1x32x32xbf16>
    %17 = vector.shape_cast %16 : vector<1x32x32xbf16> to vector<32x32xbf16>
    %cst_14 = arith.constant dense<0.000000e+00> : vector<8x32xf32>
    %18 = tpu.matmul %15, %17, %cst_14 {dimension_numbers = #tpu.dot_dimension_numbers<[1], [0], [0], [1], [0, 0, 1, 1], [], []>} : vector<8x32xbf16>, vector<32x32xbf16>, vector<8x32xf32> -> vector<8x32xf32>
    %c0_15 = arith.constant 0 : index
    %c0_16 = arith.constant 0 : index
    %c0_17 = arith.constant 0 : index
    %19 = vector.load %arg10[%c0_15, %c0_16, %c0_17] : memref<1x1x32xf32, #tpu.memory_space<vmem>>, vector<1x1x32xf32>
    %20 = vector.shape_cast %19 : vector<1x1x32xf32> to vector<1x32xf32>
    %21 = vector.broadcast %20 : vector<1x32xf32> to vector<8x32xf32>
    %22 = arith.addf %18, %21 : vector<8x32xf32>
    %cst_18 = arith.constant 0.000000e+00 : f32
    %23 = vector.broadcast %cst_18 : f32 to vector<8x32xf32>
    %24 = arith.maximumf %22, %23 : vector<8x32xf32>
    %25 = arith.truncf %24 : vector<8x32xf32> to vector<8x32xbf16>
    %c0_19 = arith.constant 0 : index
    %c0_20 = arith.constant 0 : index
    %c0_21 = arith.constant 0 : index
    %26 = vector.load %arg11[%c0_19, %c0_20, %c0_21] : memref<1x32x32xbf16, #tpu.memory_space<vmem>>, vector<1x32x32xbf16>
    %27 = vector.shape_cast %26 : vector<1x32x32xbf16> to vector<32x32xbf16>
    %cst_22 = arith.constant dense<0.000000e+00> : vector<8x32xf32>
    %28 = tpu.matmul %25, %27, %cst_22 {dimension_numbers = #tpu.dot_dimension_numbers<[1], [0], [0], [1], [0, 0, 1, 1], [], []>} : vector<8x32xbf16>, vector<32x32xbf16>, vector<8x32xf32> -> vector<8x32xf32>
    %c0_23 = arith.constant 0 : index
    %c0_24 = arith.constant 0 : index
    %c0_25 = arith.constant 0 : index
    %29 = vector.load %arg12[%c0_23, %c0_24, %c0_25] : memref<1x1x32xf32, #tpu.memory_space<vmem>>, vector<1x1x32xf32>
    %30 = vector.shape_cast %29 : vector<1x1x32xf32> to vector<1x32xf32>
    %31 = vector.broadcast %30 : vector<1x32xf32> to vector<8x32xf32>
    %32 = arith.addf %28, %31 : vector<8x32xf32>
    %33 = arith.addf %32, %3 : vector<8x32xf32>
    %cst_26 = arith.constant 0.999994993 : f32
    %34 = vector.broadcast %cst_26 : f32 to vector<8x32xf32>
    %35 = arith.mulf %33, %34 : vector<8x32xf32>
    %36 = arith.truncf %3 : vector<8x32xf32> to vector<8x32xbf16>
    %37 = vector.shape_cast %36 : vector<8x32xbf16> to vector<1x8x32xbf16>
    %38 = vector.broadcast %37 : vector<1x8x32xbf16> to vector<4x8x32xbf16>
    %c0_27 = arith.constant 0 : index
    %c0_28 = arith.constant 0 : index
    %c0_29 = arith.constant 0 : index
    %c0_30 = arith.constant 0 : index
    %39 = vector.load %arg13[%c0_27, %c0_28, %c0_29, %c0_30] : memref<1x4x32x48xbf16, #tpu.memory_space<vmem>>, vector<1x4x32x48xbf16>
    %40 = vector.shape_cast %39 : vector<1x4x32x48xbf16> to vector<4x32x48xbf16>
    %cst_31 = arith.constant dense<0.000000e+00> : vector<4x8x48xf32>
    %41 = tpu.matmul %38, %40, %cst_31 {dimension_numbers = #tpu.dot_dimension_numbers<[2], [1], [1], [2], [0, 0, 0, 1, 1, 2], [0], [0]>} : vector<4x8x32xbf16>, vector<4x32x48xbf16>, vector<4x8x48xf32> -> vector<4x8x48xf32>
    %c0_32 = arith.constant 0 : index
    %c0_33 = arith.constant 0 : index
    %c0_34 = arith.constant 0 : index
    %c0_35 = arith.constant 0 : index
    %42 = vector.load %arg14[%c0_32, %c0_33, %c0_34, %c0_35] : memref<1x4x1x48xf32, #tpu.memory_space<vmem>>, vector<1x4x1x48xf32>
    %43 = vector.shape_cast %42 : vector<1x4x1x48xf32> to vector<4x1x48xf32>
    %44 = vector.broadcast %43 : vector<4x1x48xf32> to vector<4x8x48xf32>
    %45 = arith.addf %41, %44 : vector<4x8x48xf32>
    %46 = vector.extract_strided_slice %45 {offsets = [0, 0, 0], sizes = [4, 8, 8], strides = [1, 1, 1]} : vector<4x8x48xf32> to vector<4x8x8xf32>
    %47 = vector.extract_strided_slice %45 {offsets = [0, 0, 8], sizes = [4, 8, 8], strides = [1, 1, 1]} : vector<4x8x48xf32> to vector<4x8x8xf32>
    %48 = vector.extract_strided_slice %45 {offsets = [0, 0, 16], sizes = [4, 8, 32], strides = [1, 1, 1]} : vector<4x8x48xf32> to vector<4x8x32xf32>
    %49 = arith.truncf %46 : vector<4x8x8xf32> to vector<4x8x8xbf16>
    %50 = arith.truncf %47 : vector<4x8x8xf32> to vector<4x8x8xbf16>
    %cst_36 = arith.constant dense<0.000000e+00> : vector<4x8x8xf32>
    %51 = tpu.matmul %49, %50, %cst_36 {dimension_numbers = #tpu.dot_dimension_numbers<[2], [2], [1], [1], [0, 0, 0, 1, 1, 1], [0], [0]>} : vector<4x8x8xbf16>, vector<4x8x8xbf16>, vector<4x8x8xf32> -> vector<4x8x8xf32>
    %cst_37 = arith.constant dense<0xFF800000> : vector<4x8xf32>
    %52 = vector.multi_reduction <maximumf>, %51, %cst_37 [2] : vector<4x8x8xf32> to vector<4x8xf32>
    %53 = vector.shape_cast %52 : vector<4x8xf32> to vector<4x8x1xf32>
    %54 = vector.broadcast %53 : vector<4x8x1xf32> to vector<4x8x8xf32>
    %55 = arith.subf %51, %54 : vector<4x8x8xf32>
    %56 = math.exp %55 : vector<4x8x8xf32>
    %cst_38 = arith.constant dense<0.000000e+00> : vector<4x8xf32>
    %57 = vector.multi_reduction <add>, %56, %cst_38 [2] : vector<4x8x8xf32> to vector<4x8xf32>
    %58 = vector.shape_cast %57 : vector<4x8xf32> to vector<4x8x1xf32>
    %59 = tpu.reciprocal %58 {approx = true} : vector<4x8x1xf32> -> vector<4x8x1xf32>
    %60 = vector.broadcast %59 : vector<4x8x1xf32> to vector<4x8x8xf32>
    %61 = arith.mulf %56, %60 : vector<4x8x8xf32>
    %62 = arith.truncf %61 : vector<4x8x8xf32> to vector<4x8x8xbf16>
    %63 = arith.truncf %48 : vector<4x8x32xf32> to vector<4x8x32xbf16>
    %cst_39 = arith.constant dense<0.000000e+00> : vector<4x8x32xf32>
    %64 = tpu.matmul %62, %63, %cst_39 {dimension_numbers = #tpu.dot_dimension_numbers<[2], [1], [1], [2], [0, 0, 0, 1, 1, 2], [0], [0]>} : vector<4x8x8xbf16>, vector<4x8x32xbf16>, vector<4x8x32xf32> -> vector<4x8x32xf32>
    %cst_40 = arith.constant dense<0.000000e+00> : vector<8x32xf32>
    %65 = vector.multi_reduction <add>, %64, %cst_40 [0] : vector<4x8x32xf32> to vector<8x32xf32>
    %c0_41 = arith.constant 0 : index
    %c0_42 = arith.constant 0 : index
    %c0_43 = arith.constant 0 : index
    %66 = vector.load %arg15[%c0_41, %c0_42, %c0_43] : memref<1x1x32xf32, #tpu.memory_space<vmem>>, vector<1x1x32xf32>
    %67 = vector.shape_cast %66 : vector<1x1x32xf32> to vector<1x32xf32>
    %68 = vector.broadcast %67 : vector<1x32xf32> to vector<8x32xf32>
    %69 = arith.addf %65, %68 : vector<8x32xf32>
    %70 = arith.addf %69, %3 : vector<8x32xf32>
    %cst_44 = arith.constant 0.999994993 : f32
    %71 = vector.broadcast %cst_44 : f32 to vector<8x32xf32>
    %72 = arith.mulf %70, %71 : vector<8x32xf32>
    %73 = arith.addf %35, %72 : vector<8x32xf32>
    %74 = arith.truncf %73 : vector<8x32xf32> to vector<8x32xbf16>
    %c0_45 = arith.constant 0 : index
    %c0_46 = arith.constant 0 : index
    %c0_47 = arith.constant 0 : index
    %75 = vector.load %arg16[%c0_45, %c0_46, %c0_47] : memref<1x32x64xbf16, #tpu.memory_space<vmem>>, vector<1x32x64xbf16>
    %76 = vector.shape_cast %75 : vector<1x32x64xbf16> to vector<32x64xbf16>
    %cst_48 = arith.constant dense<0.000000e+00> : vector<8x64xf32>
    %77 = tpu.matmul %74, %76, %cst_48 {dimension_numbers = #tpu.dot_dimension_numbers<[1], [0], [0], [1], [0, 0, 1, 1], [], []>} : vector<8x32xbf16>, vector<32x64xbf16>, vector<8x64xf32> -> vector<8x64xf32>
    %c0_49 = arith.constant 0 : index
    %c0_50 = arith.constant 0 : index
    %c0_51 = arith.constant 0 : index
    %78 = vector.load %arg17[%c0_49, %c0_50, %c0_51] : memref<1x1x64xf32, #tpu.memory_space<vmem>>, vector<1x1x64xf32>
    %79 = vector.shape_cast %78 : vector<1x1x64xf32> to vector<1x64xf32>
    %80 = vector.broadcast %79 : vector<1x64xf32> to vector<8x64xf32>
    %81 = arith.addf %77, %80 : vector<8x64xf32>
    %cst_52 = arith.constant 0.000000e+00 : f32
    %82 = vector.broadcast %cst_52 : f32 to vector<8x64xf32>
    %83 = arith.maximumf %81, %82 : vector<8x64xf32>
    %84 = arith.truncf %83 : vector<8x64xf32> to vector<8x64xbf16>
    %c0_53 = arith.constant 0 : index
    %c0_54 = arith.constant 0 : index
    %c0_55 = arith.constant 0 : index
    %85 = vector.load %arg18[%c0_53, %c0_54, %c0_55] : memref<1x64x32xbf16, #tpu.memory_space<vmem>>, vector<1x64x32xbf16>
    %86 = vector.shape_cast %85 : vector<1x64x32xbf16> to vector<64x32xbf16>
    %cst_56 = arith.constant dense<0.000000e+00> : vector<8x32xf32>
    %87 = tpu.matmul %84, %86, %cst_56 {dimension_numbers = #tpu.dot_dimension_numbers<[1], [0], [0], [1], [0, 0, 1, 1], [], []>} : vector<8x64xbf16>, vector<64x32xbf16>, vector<8x32xf32> -> vector<8x32xf32>
    %c0_57 = arith.constant 0 : index
    %c0_58 = arith.constant 0 : index
    %c0_59 = arith.constant 0 : index
    %88 = vector.load %arg19[%c0_57, %c0_58, %c0_59] : memref<1x1x32xf32, #tpu.memory_space<vmem>>, vector<1x1x32xf32>
    %89 = vector.shape_cast %88 : vector<1x1x32xf32> to vector<1x32xf32>
    %90 = vector.broadcast %89 : vector<1x32xf32> to vector<8x32xf32>
    %91 = arith.addf %87, %90 : vector<8x32xf32>
    %92 = arith.addf %73, %91 : vector<8x32xf32>
    %cst_60 = arith.constant 0.999994993 : f32
    %93 = vector.broadcast %cst_60 : f32 to vector<8x32xf32>
    %94 = arith.mulf %92, %93 : vector<8x32xf32>
    %c0_61 = arith.constant 0 : index
    %c0_62 = arith.constant 0 : index
    %95 = vector.load %arg20[%c0_61, %c0_62] : memref<8x32xf32, #tpu.memory_space<vmem>>, vector<8x32xf32>
    tpu.vector_store %arg20[%c0_61, %c0_62], %94 {strides = array<i32>} : memref<8x32xf32, #tpu.memory_space<vmem>>, vector<8x32xf32>,
    return
  }
  func.func @transform_0(%arg0: i32) -> (i32, i32) {
    %c0_i32 = arith.constant 0 : i32
    %c0_i32_0 = arith.constant 0 : i32
    %c0_i32_1 = arith.constant 0 : i32
    return %c0_i32, %c0_i32_0 : i32, i32
  }
  func.func @transform_1(%arg0: i32) -> (i32, i32) {
    %c0_i32 = arith.constant 0 : i32
    %c0_i32_0 = arith.constant 0 : i32
    %c0_i32_1 = arith.constant 0 : i32
    return %c0_i32, %c0_i32_0 : i32, i32
  }
  func.func @transform_2(%arg0: i32) -> (i32, i32) {
    %c0_i32 = arith.constant 0 : i32
    %c0_i32_0 = arith.constant 0 : i32
    %c0_i32_1 = arith.constant 0 : i32
    return %c0_i32, %c0_i32_0 : i32, i32
  }
  func.func @transform_3(%arg0: i32) -> (i32, i32) {
    %c0_i32 = arith.constant 0 : i32
    %c0_i32_0 = arith.constant 0 : i32
    %c0_i32_1 = arith.constant 0 : i32
    return %c0_i32, %c0_i32_0 : i32, i32
  }
  func.func @transform_4(%arg0: i32) -> (i32, i32) {
    %c0_i32 = arith.constant 0 : i32
    %c0_i32_0 = arith.constant 0 : i32
    %c0_i32_1 = arith.constant 0 : i32
    return %c0_i32, %c0_i32_0 : i32, i32
  }
  func.func @transform_5(%arg0: i32) -> (i32, i32) {
    %c0_i32 = arith.constant 0 : i32
    %c0_i32_0 = arith.constant 0 : i32
    %c0_i32_1 = arith.constant 0 : i32
    return %c0_i32, %c0_i32_0 : i32, i32
  }
  func.func @transform_6(%arg0: i32) -> (i32, i32) {
    %c0_i32 = arith.constant 0 : i32
    %c0_i32_0 = arith.constant 0 : i32
    %c0_i32_1 = arith.constant 0 : i32
    return %c0_i32, %c0_i32_0 : i32, i32
  }
  func.func @transform_7(%arg0: i32) -> (i32, i32) {
    %c0_i32 = arith.constant 0 : i32
    %c0_i32_0 = arith.constant 0 : i32
    %c0_i32_1 = arith.constant 0 : i32
    return %c0_i32, %c0_i32_0 : i32, i32
  }
  func.func @transform_8(%arg0: i32) -> (i32, i32, i32) {
    %c0_i32 = arith.constant 0 : i32
    %c0_i32_0 = arith.constant 0 : i32
    %c0_i32_1 = arith.constant 0 : i32
    return %arg0, %c0_i32, %c0_i32_0 : i32, i32, i32
  }
  func.func @transform_9(%arg0: i32) -> (i32, i32, i32) {
    %c0_i32 = arith.constant 0 : i32
    %c0_i32_0 = arith.constant 0 : i32
    %c0_i32_1 = arith.constant 0 : i32
    return %arg0, %c0_i32, %c0_i32_0 : i32, i32, i32
  }
  func.func @transform_10(%arg0: i32) -> (i32, i32, i32) {
    %c0_i32 = arith.constant 0 : i32
    %c0_i32_0 = arith.constant 0 : i32
    %c0_i32_1 = arith.constant 0 : i32
    return %arg0, %c0_i32, %c0_i32_0 : i32, i32, i32
  }
  func.func @transform_11(%arg0: i32) -> (i32, i32, i32) {
    %c0_i32 = arith.constant 0 : i32
    %c0_i32_0 = arith.constant 0 : i32
    %c0_i32_1 = arith.constant 0 : i32
    return %arg0, %c0_i32, %c0_i32_0 : i32, i32, i32
  }
  func.func @transform_12(%arg0: i32) -> (i32, i32, i32, i32) {
    %c0_i32 = arith.constant 0 : i32
    %c0_i32_0 = arith.constant 0 : i32
    %c0_i32_1 = arith.constant 0 : i32
    %c0_i32_2 = arith.constant 0 : i32
    return %arg0, %c0_i32, %c0_i32_0, %c0_i32_1 : i32, i32, i32, i32
  }
  func.func @transform_13(%arg0: i32) -> (i32, i32, i32, i32) {
    %c0_i32 = arith.constant 0 : i32
    %c0_i32_0 = arith.constant 0 : i32
    %c0_i32_1 = arith.constant 0 : i32
    %c0_i32_2 = arith.constant 0 : i32
    return %arg0, %c0_i32, %c0_i32_0, %c0_i32_1 : i32, i32, i32, i32
  }
  func.func @transform_14(%arg0: i32) -> (i32, i32, i32) {
    %c0_i32 = arith.constant 0 : i32
    %c0_i32_0 = arith.constant 0 : i32
    %c0_i32_1 = arith.constant 0 : i32
    return %arg0, %c0_i32, %c0_i32_0 : i32, i32, i32
  }
  func.func @transform_15(%arg0: i32) -> (i32, i32, i32) {
    %c0_i32 = arith.constant 0 : i32
    %c0_i32_0 = arith.constant 0 : i32
    %c0_i32_1 = arith.constant 0 : i32
    return %arg0, %c0_i32, %c0_i32_0 : i32, i32, i32
  }
  func.func @transform_16(%arg0: i32) -> (i32, i32, i32) {
    %c0_i32 = arith.constant 0 : i32
    %c0_i32_0 = arith.constant 0 : i32
    %c0_i32_1 = arith.constant 0 : i32
    return %arg0, %c0_i32, %c0_i32_0 : i32, i32, i32
  }
  func.func @transform_17(%arg0: i32) -> (i32, i32, i32) {
    %c0_i32 = arith.constant 0 : i32
    %c0_i32_0 = arith.constant 0 : i32
    %c0_i32_1 = arith.constant 0 : i32
    return %arg0, %c0_i32, %c0_i32_0 : i32, i32, i32
  }
  func.func @transform_18(%arg0: i32) -> (i32, i32, i32) {
    %c0_i32 = arith.constant 0 : i32
    %c0_i32_0 = arith.constant 0 : i32
    %c0_i32_1 = arith.constant 0 : i32
    return %arg0, %c0_i32, %c0_i32_0 : i32, i32, i32
  }
  func.func @transform_19(%arg0: i32) -> (i32, i32) {
    %c0_i32 = arith.constant 0 : i32
    %c0_i32_0 = arith.constant 0 : i32
    %c0_i32_1 = arith.constant 0 : i32
    return %c0_i32, %c0_i32_0 : i32, i32
  }
}

</mosaic_0001>

<llo_original>
// kernel: graphgps_forward.1
$region0: #{graphgps_forward.1}
  #allocation0 [shape = 'u32[]', space=smem, size = 0x4, offset = 0x4, fixed_abs, tag = 'smem constant byte address 0x4 - core index']
  #allocation1 [shape = 'u32[144,128]{1,0:T(1,128)}', space=vmem, size = 0x12000, scoped, tag = 'internal scratch']
  #allocation2 [shape = 'f32[16,8]{1,0:T(8,128)}', space=vmem, size = 0x2000, scoped, tag = 'scratch operand']
  #allocation3 [shape = 'f32[8,16]{1,0:T(8,128)}', space=vmem, size = 0x1000, scoped, tag = 'scratch operand']
  #allocation4 [shape = 'f32[16,32]{1,0:T(8,128)}', space=vmem, size = 0x2000, scoped, tag = 'scratch operand']
  %s0 = inlined_call_operand.vmem [shape: f32[8,6], index: 0, kind: input, shape index: {}]
  %s1 = inlined_call_operand.vmem [shape: s32[16,1], index: 1, kind: input, shape index: {}]
  %s2 = inlined_call_operand.vmem [shape: s32[1,16], index: 2, kind: input, shape index: {}]
  %s3 = inlined_call_operand.vmem [shape: f32[16,1], index: 3, kind: input, shape index: {}]
  %s4 = inlined_call_operand.hbm [shape: bf16[6,32], index: 4, kind: input, shape index: {}]
  %s5 = inlined_call_operand.hbm [shape: f32[1,32], index: 5, kind: input, shape index: {}]
  %s6 = inlined_call_operand.hbm [shape: f32[1,32], index: 6, kind: input, shape index: {}]
  %s7 = inlined_call_operand.hbm [shape: f32[1,32], index: 7, kind: input, shape index: {}]
  %s8 = inlined_call_operand.vmem [shape: bf16[2,32,32], index: 8, kind: input, shape index: {}]
  %s9 = inlined_call_operand.vmem [shape: f32[2,1,32], index: 9, kind: input, shape index: {}]
  %s10 = inlined_call_operand.vmem [shape: bf16[2,32,32], index: 10, kind: input, shape index: {}]
  %s11 = inlined_call_operand.hbm [shape: f32[2,1,32], index: 11, kind: input, shape index: {}]
  %s12 = inlined_call_operand.vmem [shape: bf16[2,4,32,48], index: 12, kind: input, shape index: {}]
  %s13 = inlined_call_operand.hbm [shape: f32[2,4,1,48], index: 13, kind: input, shape index: {}]
  %s14 = inlined_call_operand.hbm [shape: f32[2,1,32], index: 14, kind: input, shape index: {}]
  %s15 = inlined_call_operand.hbm [shape: bf16[2,32,64], index: 15, kind: input, shape index: {}]
  %s16 = inlined_call_operand.hbm [shape: f32[2,1,64], index: 16, kind: input, shape index: {}]
  %s17 = inlined_call_operand.vmem [shape: bf16[2,64,32], index: 17, kind: input, shape index: {}]
  %s18 = inlined_call_operand.hbm [shape: f32[2,1,32], index: 18, kind: input, shape index: {}]
  %s19 = inlined_call_operand.hbm [shape: f32[8,32], index: 19, kind: output, shape index: {}]
  %s20 = sld [smem:[#allocation0]]
  $region153: #{graphgps_forward.1} parent=0
    _
  %s22 = ssub.s32 1, %s20
  %s23 = scalar_select 0, %s22, %s20
  $region1: #{graphgps_forward.1} parent=0
    #allocation5 [shape = 'u8[2048]{0}', space=vmem, size = 0x800, scoped, tag = 'input window, operand 4, single buffered']
    #allocation6 [shape = 's32[2]{0}', space=sflag, size = 0x8, scoped, tag = 'scoped memory for graphgps_forward.1']
    #allocation7 [shape = 's32[2]{0}', space=sflag, size = 0x8, scoped, tag = 'scoped memory for graphgps_forward.1']
    #allocation8 [shape = 'u8[512]{0}', space=vmem, size = 0x400, scoped, tag = 'input window, operand 5, single buffered']
    #allocation9 [shape = 's32[1]{0}', space=sflag, size = 0x4, scoped, tag = 'scoped memory for graphgps_forward.1']
    #allocation10 [shape = 'u8[512]{0}', space=vmem, size = 0x400, scoped, tag = 'input window, operand 6, single buffered']
    #allocation11 [shape = 'u8[512]{0}', space=vmem, size = 0x400, scoped, tag = 'input window, operand 7, single buffered']
    #allocation12 [shape = 's32[1]{0}', space=sflag, size = 0x4, scoped, tag = 'scoped memory for graphgps_forward.1']
    #allocation13 [shape = 'u8[1024]{0}', space=vmem, size = 0x400, scoped, tag = 'input window, operand 11']
    #allocation14 [shape = 'u8[4096]{0}', space=vmem, size = 0x1000, scoped, tag = 'input window, operand 13']
    #allocation15 [shape = 'u8[1024]{0}', space=vmem, size = 0x400, scoped, tag = 'input window, operand 14']
    #allocation16 [shape = 'u8[16384]{0}', space=vmem, size = 0x4000, scoped, tag = 'input window, operand 15']
    #allocation17 [shape = 'u8[1024]{0}', space=vmem, size = 0x400, scoped, tag = 'input window, operand 16']
    #allocation18 [shape = 'u8[1024]{0}', space=vmem, size = 0x400, scoped, tag = 'input window, operand 18']
    #allocation19 [shape = 'u8[4096]{0}', space=vmem, size = 0x1000, scoped, tag = 'output window, operand 0, single buffered']
    %24 = vsyncpa [#allocation6], 0
    %25 = vsyncpa [#allocation9], 0
    %26 = vsyncpa [#allocation12], 0
    %27 = vsyncpa [#allocation7], 0
    loop: start=0, step=1, limit=4
    $region2: #{graphgps_forward.1} parent=1 // loop_pre_header
      _
    $region3: #{graphgps_forward.1} parent=1 // loop_header
      %s29 = sphi 0, %s33
      %p30 = scmp.ge.s32.totalorder %s29, 4
      %s37 = sphi 0, %s37
      %s39 = sphi 0, %s37
      %s40 = sphi 0, %s39
      %s54 = sphi 0, %s40
      %s58 = sphi 0, %s58
      %s60 = sphi 0, %s58
      %s61 = sphi 0, %s60
      %s75 = sphi 0, %s61
      %s79 = sphi 0, %s79
      %s81 = sphi 0, %s79
      %s82 = sphi 0, %s81
      %s96 = sphi 0, %s82
      %s100 = sphi 0, %s100
      %s102 = sphi 0, %s100
      %s103 = sphi 0, %s102
      %s117 = sphi 0, %s103
      %s121 = sphi 0, %s121
      %s123 = sphi 0, %s121
      %s124 = sphi 0, %s123
      %s138 = sphi 0, %s124
      %s142 = sphi 0, %s142
      %s144 = sphi 0, %s142
      %s145 = sphi 0, %s144
      %s159 = sphi 0, %s145
      %s163 = sphi 0, %s163
      %s165 = sphi 0, %s163
      %s166 = sphi 0, %s165
      %s180 = sphi 0, %s166
      %s184 = sphi 0, %s184
      %s186 = sphi 0, %s184
      %s187 = sphi 0, %s186
      %s201 = sphi 0, %s187
      %s207 = sphi 0, %s209
      %s210 = sphi 0, %s207
      %s211 = sphi 0, %s210
      %s227 = sphi 0, %s211
      %s233 = sphi 0, %s235
      %s236 = sphi 0, %s233
      %s237 = sphi 0, %s236
      %s253 = sphi 0, %s237
      %s259 = sphi 0, %s261
      %s262 = sphi 0, %s259
      %s263 = sphi 0, %s262
      %s279 = sphi 0, %s263
      %s285 = sphi 0, %s287
      %s288 = sphi 0, %s285
      %s289 = sphi 0, %s288
      %s305 = sphi 0, %s289
      %s311 = sphi 0, %s313
      %s314 = sphi 0, %s311
      %s315 = sphi 0, %s314
      %s331 = sphi 0, %s315
      %s337 = sphi 0, %s339
      %s340 = sphi 0, %s337
      %s341 = sphi 0, %s340
      %s357 = sphi 0, %s341
      %s363 = sphi 0, %s365
      %s366 = sphi 0, %s363
      %s367 = sphi 0, %s366
      %s383 = sphi 0, %s367
      %s389 = sphi 0, %s391
      %s392 = sphi 0, %s389
      %s393 = sphi 0, %s392
      %s409 = sphi 0, %s393
      %s415 = sphi 0, %s417
      %s418 = sphi 0, %s415
      %s419 = sphi 0, %s418
      %s435 = sphi 0, %s419
      %s441 = sphi 0, %s443
      %s444 = sphi 0, %s441
      %s445 = sphi 0, %s444
      %s461 = sphi 0, %s445
      %s467 = sphi 0, %s469
      %s470 = sphi 0, %s467
      %s471 = sphi 0, %s470
      %s487 = sphi 0, %s471
      %s491 = sphi 0, %s491
      %s493 = sphi 0, %s491
      %s494 = sphi 0, %s493
      %s508 = sphi 0, %s494
    $region4: #{graphgps_forward.1} parent=1 // loop_header_branch
      %32 = sbr.rel (%p30) target = $region8
    $region5: #{graphgps_forward.1} parent=1 // loop_body
      %s34 = ssub.s32 %s29, 1
      %s35 = ssub.s32 %s29, 2
      %s36 = sadd.s32 %s29, 1
      %s38 = sadd.s32 %s37, 1
      %p41 = scmp.eq.s32.totalorder %s29, 1
      %p42 = scmp.ne.s32.totalorder %s37, %s39
      %p43 = scmp.eq.s32.totalorder %s29, 0
      %p44 = por %p42, %p43
      %p45 = scmp.ne.s32.totalorder %s37, %s39
      %p46 = scmp.eq.s32.totalorder %s34, 1
      %p47 = por %p45, %p46
      %p48 = scmp.ne.s32.totalorder %s39, %s40
      %p49 = scmp.eq.s32.totalorder %s34, 0
      %p50 = por %p48, %p49
      %p51 = scmp.ne.s32.totalorder %s39, %s40
      %p52 = scmp.eq.s32.totalorder %s35, 1
      %p53 = por %p51, %p52
      %p55 = scmp.ne.s32.totalorder %s40, %s54
      %p56 = scmp.eq.s32.totalorder %s35, 0
      %p57 = por %p55, %p56
      %s59 = sadd.s32 %s58, 1
      %p62 = scmp.eq.s32.totalorder %s29, 1
      %p63 = scmp.ne.s32.totalorder %s58, %s60
      %p64 = scmp.eq.s32.totalorder %s29, 0
      %p65 = por %p63, %p64
      %p66 = scmp.ne.s32.totalorder %s58, %s60
      %p67 = scmp.eq.s32.totalorder %s34, 1
      %p68 = por %p66, %p67
      %p69 = scmp.ne.s32.totalorder %s60, %s61
      %p70 = scmp.eq.s32.totalorder %s34, 0
      %p71 = por %p69, %p70
      %p72 = scmp.ne.s32.totalorder %s60, %s61
      %p73 = scmp.eq.s32.totalorder %s35, 1
      %p74 = por %p72, %p73
      %p76 = scmp.ne.s32.totalorder %s61, %s75
      %p77 = scmp.eq.s32.totalorder %s35, 0
      %p78 = por %p76, %p77
      %s80 = sadd.s32 %s79, 1
      %p83 = scmp.eq.s32.totalorder %s29, 1
      %p84 = scmp.ne.s32.totalorder %s79, %s81
      %p85 = scmp.eq.s32.totalorder %s29, 0
      %p86 = por %p84, %p85
      %p87 = scmp.ne.s32.totalorder %s79, %s81
      %p88 = scmp.eq.s32.totalorder %s34, 1
      %p89 = por %p87, %p88
      %p90 = scmp.ne.s32.totalorder %s81, %s82
      %p91 = scmp.eq.s32.totalorder %s34, 0
      %p92 = por %p90, %p91
      %p93 = scmp.ne.s32.totalorder %s81, %s82
      %p94 = scmp.eq.s32.totalorder %s35, 1
      %p95 = por %p93, %p94
      %p97 = scmp.ne.s32.totalorder %s82, %s96
      %p98 = scmp.eq.s32.totalorder %s35, 0
      %p99 = por %p97, %p98
      %s101 = sadd.s32 %s100, 1
      %p104 = scmp.eq.s32.totalorder %s29, 1
      %p105 = scmp.ne.s32.totalorder %s100, %s102
      %p106 = scmp.eq.s32.totalorder %s29, 0
      %p107 = por %p105, %p106
      %p108 = scmp.ne.s32.totalorder %s100, %s102
      %p109 = scmp.eq.s32.totalorder %s34, 1
      %p110 = por %p108, %p109
      %p111 = scmp.ne.s32.totalorder %s102, %s103
      %p112 = scmp.eq.s32.totalorder %s34, 0
      %p113 = por %p111, %p112
      %p114 = scmp.ne.s32.totalorder %s102, %s103
      %p115 = scmp.eq.s32.totalorder %s35, 1
      %p116 = por %p114, %p115
      %p118 = scmp.ne.s32.totalorder %s103, %s117
      %p119 = scmp.eq.s32.totalorder %s35, 0
      %p120 = por %p118, %p119
      %s122 = sadd.s32 %s121, 1
      %p125 = scmp.eq.s32.totalorder %s29, 1
      %p126 = scmp.ne.s32.totalorder %s121, %s123
      %p127 = scmp.eq.s32.totalorder %s29, 0
      %p128 = por %p126, %p127
      %p129 = scmp.ne.s32.totalorder %s121, %s123
      %p130 = scmp.eq.s32.totalorder %s34, 1
      %p131 = por %p129, %p130
      %p132 = scmp.ne.s32.totalorder %s123, %s124
      %p133 = scmp.eq.s32.totalorder %s34, 0
      %p134 = por %p132, %p133
      %p135 = scmp.ne.s32.totalorder %s123, %s124
      %p136 = scmp.eq.s32.totalorder %s35, 1
      %p137 = por %p135, %p136
      %p139 = scmp.ne.s32.totalorder %s124, %s138
      %p140 = scmp.eq.s32.totalorder %s35, 0
      %p141 = por %p139, %p140
      %s143 = sadd.s32 %s142, 1
      %p146 = scmp.eq.s32.totalorder %s29, 1
      %p147 = scmp.ne.s32.totalorder %s142, %s144
      %p148 = scmp.eq.s32.totalorder %s29, 0
      %p149 = por %p147, %p148
      %p150 = scmp.ne.s32.totalorder %s142, %s144
      %p151 = scmp.eq.s32.totalorder %s34, 1
      %p152 = por %p150, %p151
      %p153 = scmp.ne.s32.totalorder %s144, %s145
      %p154 = scmp.eq.s32.totalorder %s34, 0
      %p155 = por %p153, %p154
      %p156 = scmp.ne.s32.totalorder %s144, %s145
      %p157 = scmp.eq.s32.totalorder %s35, 1
      %p158 = por %p156, %p157
      %p160 = scmp.ne.s32.totalorder %s145, %s159
      %p161 = scmp.eq.s32.totalorder %s35, 0
      %p162 = por %p160, %p161
      %s164 = sadd.s32 %s163, 1
      %p167 = scmp.eq.s32.totalorder %s29, 1
      %p168 = scmp.ne.s32.totalorder %s163, %s165
      %p169 = scmp.eq.s32.totalorder %s29, 0
      %p170 = por %p168, %p169
      %p171 = scmp.ne.s32.totalorder %s163, %s165
      %p172 = scmp.eq.s32.totalorder %s34, 1
      %p173 = por %p171, %p172
      %p174 = scmp.ne.s32.totalorder %s165, %s166
      %p175 = scmp.eq.s32.totalorder %s34, 0
      %p176 = por %p174, %p175
      %p177 = scmp.ne.s32.totalorder %s165, %s166
      %p178 = scmp.eq.s32.totalorder %s35, 1
      %p179 = por %p177, %p178
      %p181 = scmp.ne.s32.totalorder %s166, %s180
      %p182 = scmp.eq.s32.totalorder %s35, 0
      %p183 = por %p181, %p182
      %s185 = sadd.s32 %s184, 1
      %p188 = scmp.eq.s32.totalorder %s29, 1
      %p189 = scmp.ne.s32.totalorder %s184, %s186
      %p190 = scmp.eq.s32.totalorder %s29, 0
      %p191 = por %p189, %p190
      %p192 = scmp.ne.s32.totalorder %s184, %s186
      %p193 = scmp.eq.s32.totalorder %s34, 1
      %p194 = por %p192, %p193
      %p195 = scmp.ne.s32.totalorder %s186, %s187
      %p196 = scmp.eq.s32.totalorder %s34, 0
      %p197 = por %p195, %p196
      %p198 = scmp.ne.s32.totalorder %s186, %s187
      %p199 = scmp.eq.s32.totalorder %s35, 1
      %p200 = por %p198, %p199
      %p202 = scmp.ne.s32.totalorder %s187, %s201
      %p203 = scmp.eq.s32.totalorder %s35, 0
      %p204 = por %p202, %p203
      %s205 = ssub.s32 %s29, %s36
      %p206 = scmp.eq.s32.totalorder %s205, 0
      %s208 = sadd.s32 %s207, 1
      %s209 = scalar_select %p206, %s207, %s208
      %p212 = pneg %p206
      %p213 = scmp.eq.s32.totalorder %s29, 1
      %p214 = por %p212, %p213
      %p215 = scmp.ne.s32.totalorder %s207, %s210
      %p216 = scmp.eq.s32.totalorder %s29, 0
      %p217 = por %p215, %p216
      %p218 = scmp.ne.s32.totalorder %s207, %s210
      %p219 = scmp.eq.s32.totalorder %s34, 1
      %p220 = por %p218, %p219
      %p221 = scmp.ne.s32.totalorder %s210, %s211
      %p222 = scmp.eq.s32.totalorder %s34, 0
      %p223 = por %p221, %p222
      %p224 = scmp.ne.s32.totalorder %s210, %s211
      %p225 = scmp.eq.s32.totalorder %s35, 1
      %p226 = por %p224, %p225
      %p228 = scmp.ne.s32.totalorder %s211, %s227
      %p229 = scmp.eq.s32.totalorder %s35, 0
      %p230 = por %p228, %p229
      %s231 = ssub.s32 %s29, %s36
      %p232 = scmp.eq.s32.totalorder %s231, 0
      %s234 = sadd.s32 %s233, 1
      %s235 = scalar_select %p232, %s233, %s234
      %p238 = pneg %p232
      %p239 = scmp.eq.s32.totalorder %s29, 1
      %p240 = por %p238, %p239
      %p241 = scmp.ne.s32.totalorder %s233, %s236
      %p242 = scmp.eq.s32.totalorder %s29, 0
      %p243 = por %p241, %p242
      %p244 = scmp.ne.s32.totalorder %s233, %s236
      %p245 = scmp.eq.s32.totalorder %s34, 1
      %p246 = por %p244, %p245
      %p247 = scmp.ne.s32.totalorder %s236, %s237
      %p248 = scmp.eq.s32.totalorder %s34, 0
      %p249 = por %p247, %p248
      %p250 = scmp.ne.s32.totalorder %s236, %s237
      %p251 = scmp.eq.s32.totalorder %s35, 1
      %p252 = por %p250, %p251
      %p254 = scmp.ne.s32.totalorder %s237, %s253
      %p255 = scmp.eq.s32.totalorder %s35, 0
      %p256 = por %p254, %p255
      %s257 = ssub.s32 %s29, %s36
      %p258 = scmp.eq.s32.totalorder %s257, 0
      %s260 = sadd.s32 %s259, 1
      %s261 = scalar_select %p258, %s259, %s260
      %p264 = pneg %p258
      %p265 = scmp.eq.s32.totalorder %s29, 1
      %p266 = por %p264, %p265
      %p267 = scmp.ne.s32.totalorder %s259, %s262
      %p268 = scmp.eq.s32.totalorder %s29, 0
      %p269 = por %p267, %p268
      %p270 = scmp.ne.s32.totalorder %s259, %s262
      %p271 = scmp.eq.s32.totalorder %s34, 1
      %p272 = por %p270, %p271
      %p273 = scmp.ne.s32.totalorder %s262, %s263
      %p274 = scmp.eq.s32.totalorder %s34, 0
      %p275 = por %p273, %p274
      %p276 = scmp.ne.s32.totalorder %s262, %s263
      %p277 = scmp.eq.s32.totalorder %s35, 1
      %p278 = por %p276, %p277
      %p280 = scmp.ne.s32.totalorder %s263, %s279
      %p281 = scmp.eq.s32.totalorder %s35, 0
      %p282 = por %p280, %p281
      %s283 = ssub.s32 %s29, %s36
      %p284 = scmp.eq.s32.totalorder %s283, 0
      %s286 = sadd.s32 %s285, 1
      %s287 = scalar_select %p284, %s285, %s286
      %p290 = pneg %p284
      %p291 = scmp.eq.s32.totalorder %s29, 1
      %p292 = por %p290, %p291
      %p293 = scmp.ne.s32.totalorder %s285, %s288
      %p294 = scmp.eq.s32.totalorder %s29, 0
      %p295 = por %p293, %p294
      %p296 = scmp.ne.s32.totalorder %s285, %s288
      %p297 = scmp.eq.s32.totalorder %s34, 1
      %p298 = por %p296, %p297
      %p299 = scmp.ne.s32.totalorder %s288, %s289
      %p300 = scmp.eq.s32.totalorder %s34, 0
      %p301 = por %p299, %p300
      %p302 = scmp.ne.s32.totalorder %s288, %s289
      %p303 = scmp.eq.s32.totalorder %s35, 1
      %p304 = por %p302, %p303
      %p306 = scmp.ne.s32.totalorder %s289, %s305
      %p307 = scmp.eq.s32.totalorder %s35, 0
      %p308 = por %p306, %p307
      %s309 = ssub.s32 %s29, %s36
      %p310 = scmp.eq.s32.totalorder %s309, 0
      %s312 = sadd.s32 %s311, 1
      %s313 = scalar_select %p310, %s311, %s312
      %p316 = pneg %p310
      %p317 = scmp.eq.s32.totalorder %s29, 1
      %p318 = por %p316, %p317
      %p319 = scmp.ne.s32.totalorder %s311, %s314
      %p320 = scmp.eq.s32.totalorder %s29, 0
      %p321 = por %p319, %p320
      %p322 = scmp.ne.s32.totalorder %s311, %s314
      %p323 = scmp.eq.s32.totalorder %s34, 1
      %p324 = por %p322, %p323
      %p325 = scmp.ne.s32.totalorder %s314, %s315
      %p326 = scmp.eq.s32.totalorder %s34, 0
      %p327 = por %p325, %p326
      %p328 = scmp.ne.s32.totalorder %s314, %s315
      %p329 = scmp.eq.s32.totalorder %s35, 1
      %p330 = por %p328, %p329
      %p332 = scmp.ne.s32.totalorder %s315, %s331
      %p333 = scmp.eq.s32.totalorder %s35, 0
      %p334 = por %p332, %p333
      %s335 = ssub.s32 %s29, %s36
      %p336 = scmp.eq.s32.totalorder %s335, 0
      %s338 = sadd.s32 %s337, 1
      %s339 = scalar_select %p336, %s337, %s338
      %p342 = pneg %p336
      %p343 = scmp.eq.s32.totalorder %s29, 1
      %p344 = por %p342, %p343
      %p345 = scmp.ne.s32.totalorder %s337, %s340
      %p346 = scmp.eq.s32.totalorder %s29, 0
      %p347 = por %p345, %p346
      %p348 = scmp.ne.s32.totalorder %s337, %s340
      %p349 = scmp.eq.s32.totalorder %s34, 1
      %p350 = por %p348, %p349
      %p351 = scmp.ne.s32.totalorder %s340, %s341
      %p352 = scmp.eq.s32.totalorder %s34, 0
      %p353 = por %p351, %p352
      %p354 = scmp.ne.s32.totalorder %s340, %s341
      %p355 = scmp.eq.s32.totalorder %s35, 1
      %p356 = por %p354, %p355
      %p358 = scmp.ne.s32.totalorder %s341, %s357
      %p359 = scmp.eq.s32.totalorder %s35, 0
      %p360 = por %p358, %p359
      %s361 = ssub.s32 %s29, %s36
      %p362 = scmp.eq.s32.totalorder %s361, 0
      %s364 = sadd.s32 %s363, 1
      %s365 = scalar_select %p362, %s363, %s364
      %p368 = pneg %p362
      %p369 = scmp.eq.s32.totalorder %s29, 1
      %p370 = por %p368, %p369
      %p371 = scmp.ne.s32.totalorder %s363, %s366
      %p372 = scmp.eq.s32.totalorder %s29, 0
      %p373 = por %p371, %p372
      %p374 = scmp.ne.s32.totalorder %s363, %s366
      %p375 = scmp.eq.s32.totalorder %s34, 1
      %p376 = por %p374, %p375
      %p377 = scmp.ne.s32.totalorder %s366, %s367
      %p378 = scmp.eq.s32.totalorder %s34, 0
      %p379 = por %p377, %p378
      %p380 = scmp.ne.s32.totalorder %s366, %s367
      %p381 = scmp.eq.s32.totalorder %s35, 1
      %p382 = por %p380, %p381
      %p384 = scmp.ne.s32.totalorder %s367, %s383
      %p385 = scmp.eq.s32.totalorder %s35, 0
      %p386 = por %p384, %p385
      %s387 = ssub.s32 %s29, %s36
      %p388 = scmp.eq.s32.totalorder %s387, 0
      %s390 = sadd.s32 %s389, 1
      %s391 = scalar_select %p388, %s389, %s390
      %p394 = pneg %p388
      %p395 = scmp.eq.s32.totalorder %s29, 1
      %p396 = por %p394, %p395
      %p397 = scmp.ne.s32.totalorder %s389, %s392
      %p398 = scmp.eq.s32.totalorder %s29, 0
      %p399 = por %p397, %p398
      %p400 = scmp.ne.s32.totalorder %s389, %s392
      %p401 = scmp.eq.s32.totalorder %s34, 1
      %p402 = por %p400, %p401
      %p403 = scmp.ne.s32.totalorder %s392, %s393
      %p404 = scmp.eq.s32.totalorder %s34, 0
      %p405 = por %p403, %p404
      %p406 = scmp.ne.s32.totalorder %s392, %s393
      %p407 = scmp.eq.s32.totalorder %s35, 1
      %p408 = por %p406, %p407
      %p410 = scmp.ne.s32.totalorder %s393, %s409
      %p411 = scmp.eq.s32.totalorder %s35, 0
      %p412 = por %p410, %p411
      %s413 = ssub.s32 %s29, %s36
      %p414 = scmp.eq.s32.totalorder %s413, 0
      %s416 = sadd.s32 %s415, 1
      %s417 = scalar_select %p414, %s415, %s416
      %p420 = pneg %p414
      %p421 = scmp.eq.s32.totalorder %s29, 1
      %p422 = por %p420, %p421
      %p423 = scmp.ne.s32.totalorder %s415, %s418
      %p424 = scmp.eq.s32.totalorder %s29, 0
      %p425 = por %p423, %p424
      %p426 = scmp.ne.s32.totalorder %s415, %s418
      %p427 = scmp.eq.s32.totalorder %s34, 1
      %p428 = por %p426, %p427
      %p429 = scmp.ne.s32.totalorder %s418, %s419
      %p430 = scmp.eq.s32.totalorder %s34, 0
      %p431 = por %p429, %p430
      %p432 = scmp.ne.s32.totalorder %s418, %s419
      %p433 = scmp.eq.s32.totalorder %s35, 1
      %p434 = por %p432, %p433
      %p436 = scmp.ne.s32.totalorder %s419, %s435
      %p437 = scmp.eq.s32.totalorder %s35, 0
      %p438 = por %p436, %p437
      %s439 = ssub.s32 %s29, %s36
      %p440 = scmp.eq.s32.totalorder %s439, 0
      %s442 = sadd.s32 %s441, 1
      %s443 = scalar_select %p440, %s441, %s442
      %p446 = pneg %p440
      %p447 = scmp.eq.s32.totalorder %s29, 1
      %p448 = por %p446, %p447
      %p449 = scmp.ne.s32.totalorder %s441, %s444
      %p450 = scmp.eq.s32.totalorder %s29, 0
      %p451 = por %p449, %p450
      %p452 = scmp.ne.s32.totalorder %s441, %s444
      %p453 = scmp.eq.s32.totalorder %s34, 1
      %p454 = por %p452, %p453
      %p455 = scmp.ne.s32.totalorder %s444, %s445
      %p456 = scmp.eq.s32.totalorder %s34, 0
      %p457 = por %p455, %p456
      %p458 = scmp.ne.s32.totalorder %s444, %s445
      %p459 = scmp.eq.s32.totalorder %s35, 1
      %p460 = por %p458, %p459
      %p462 = scmp.ne.s32.totalorder %s445, %s461
      %p463 = scmp.eq.s32.totalorder %s35, 0
      %p464 = por %p462, %p463
      %s465 = ssub.s32 %s29, %s36
      %p466 = scmp.eq.s32.totalorder %s465, 0
      %s468 = sadd.s32 %s467, 1
      %s469 = scalar_select %p466, %s467, %s468
      %p472 = pneg %p466
      %p473 = scmp.eq.s32.totalorder %s29, 1
      %p474 = por %p472, %p473
      %p475 = scmp.ne.s32.totalorder %s467, %s470
      %p476 = scmp.eq.s32.totalorder %s29, 0
      %p477 = por %p475, %p476
      %p478 = scmp.ne.s32.totalorder %s467, %s470
      %p479 = scmp.eq.s32.totalorder %s34, 1
      %p480 = por %p478, %p479
      %p481 = scmp.ne.s32.totalorder %s470, %s471
      %p482 = scmp.eq.s32.totalorder %s34, 0
      %p483 = por %p481, %p482
      %p484 = scmp.ne.s32.totalorder %s470, %s471
      %p485 = scmp.eq.s32.totalorder %s35, 1
      %p486 = por %p484, %p485
      %p488 = scmp.ne.s32.totalorder %s471, %s487
      %p489 = scmp.eq.s32.totalorder %s35, 0
      %p490 = por %p488, %p489
      %s492 = sadd.s32 %s491, 1
      %p495 = scmp.eq.s32.totalorder %s29, 1
      %p496 = scmp.ne.s32.totalorder %s491, %s493
      %p497 = scmp.eq.s32.totalorder %s29, 0
      %p498 = por %p496, %p497
      %p499 = scmp.ne.s32.totalorder %s491, %s493
      %p500 = scmp.eq.s32.totalorder %s34, 1
      %p501 = por %p499, %p500
      %p502 = scmp.ne.s32.totalorder %s493, %s494
      %p503 = scmp.eq.s32.totalorder %s34, 0
      %p504 = por %p502, %p503
      %p505 = scmp.ne.s32.totalorder %s493, %s494
      %p506 = scmp.eq.s32.totalorder %s35, 1
      %p507 = por %p505, %p506
      %p509 = scmp.ne.s32.totalorder %s494, %s508
      %p510 = scmp.eq.s32.totalorder %s35, 0
      %p511 = por %p509, %p510
      %p512 = scmp.le.s32.totalorder 1, %s29
      %p513 = scmp.lt.s32.totalorder %s29, 3
      %p514 = pnand %p512, %p513
      %p515 = pneg %p514
      // Predicated region
      $region9: #{graphgps_forward.1} parent=5 // pred_check
        _
      $region10: #{graphgps_forward.1} parent=5 // pred_check_branch
        %517 = sbr.rel (%p514) target = $region12
      $region11: #{graphgps_forward.1} parent=5 // pred_region
        %s518 = ssub.s32 %s29, 1
        // Predicated region
        $region13: #{graphgps_forward.1} parent=11 // pred_check
          %p519 = pneg %p50
        $region14: #{graphgps_forward.1} parent=11 // pred_check_branch
          %521 = sbr.rel (%p519) target = $region16
        $region15: #{graphgps_forward.1} parent=11 // pred_region
          _
        $region16: #{graphgps_forward.1} parent=11 // pred_fallthru
          _
        // Predicated region
        $region17: #{graphgps_forward.1} parent=11 // pred_check
          %p522 = pneg %p71
        $region18: #{graphgps_forward.1} parent=11 // pred_check_branch
          %524 = sbr.rel (%p522) target = $region20
        $region19: #{graphgps_forward.1} parent=11 // pred_region
          _
        $region20: #{graphgps_forward.1} parent=11 // pred_fallthru
          _
        // Predicated region
        $region21: #{graphgps_forward.1} parent=11 // pred_check
          %p525 = pneg %p92
        $region22: #{graphgps_forward.1} parent=11 // pred_check_branch
          %527 = sbr.rel (%p525) target = $region24
        $region23: #{graphgps_forward.1} parent=11 // pred_region
          _
        $region24: #{graphgps_forward.1} parent=11 // pred_fallthru
          _
        // Predicated region
        $region25: #{graphgps_forward.1} parent=11 // pred_check
          %p528 = pneg %p113
        $region26: #{graphgps_forward.1} parent=11 // pred_check_branch
          %530 = sbr.rel (%p528) target = $region28
        $region27: #{graphgps_forward.1} parent=11 // pred_region
          _
        $region28: #{graphgps_forward.1} parent=11 // pred_fallthru
          _
        // Predicated region
        $region29: #{graphgps_forward.1} parent=11 // pred_check
          %p531 = pneg %p134
        $region30: #{graphgps_forward.1} parent=11 // pred_check_branch
          %533 = sbr.rel (%p531) target = $region32
        $region31: #{graphgps_forward.1} parent=11 // pred_region
          %s535 = ssub.s32 64, 64
          %536 = vsyncadd [#allocation6], %s535
          %s538 = sshll.u32 [#allocation5], 4
          %s539 = int_to_ptr.vmem [resolvable:$true] %s538
          %541 = dma.hbm_to_vmem [thread:$0]  %s4, 64, %s539, [#allocation6]
        $region32: #{graphgps_forward.1} parent=11 // pred_fallthru
          _
        // Predicated region
        $region33: #{graphgps_forward.1} parent=11 // pred_check
          %p542 = pneg %p155
        $region34: #{graphgps_forward.1} parent=11 // pred_check_branch
          %544 = sbr.rel (%p542) target = $region36
        $region35: #{graphgps_forward.1} parent=11 // pred_region
          %s546 = ssub.s32 16, 16
          %547 = vsyncadd [#allocation9], %s546
          %s549 = sshll.u32 [#allocation8], 4
          %s550 = int_to_ptr.vmem [resolvable:$true] %s549
          %552 = dma.hbm_to_vmem [thread:$0]  %s5, 16, %s550, [#allocation9]
        $region36: #{graphgps_forward.1} parent=11 // pred_fallthru
          _
        // Predicated region
        $region37: #{graphgps_forward.1} parent=11 // pred_check
          %p553 = pneg %p176
        $region38: #{graphgps_forward.1} parent=11 // pred_check_branch
          %555 = sbr.rel (%p553) target = $region40
        $region39: #{graphgps_forward.1} parent=11 // pred_region
          %s557 = ssub.s32 16, 16
          %558 = vsyncadd [#allocation9], %s557
          %s560 = sshll.u32 [#allocation10], 4
          %s561 = int_to_ptr.vmem [resolvable:$true] %s560
          %563 = dma.hbm_to_vmem [thread:$0]  %s6, 16, %s561, [#allocation9]
        $region40: #{graphgps_forward.1} parent=11 // pred_fallthru
          _
        // Predicated region
        $region41: #{graphgps_forward.1} parent=11 // pred_check
          %p564 = pneg %p197
        $region42: #{graphgps_forward.1} parent=11 // pred_check_branch
          %566 = sbr.rel (%p564) target = $region44
        $region43: #{graphgps_forward.1} parent=11 // pred_region
          %s568 = ssub.s32 16, 16
          %569 = vsyncadd [#allocation12], %s568
          %s571 = sshll.u32 [#allocation11], 4
          %s572 = int_to_ptr.vmem [resolvable:$true] %s571
          %574 = dma.hbm_to_vmem [thread:$0]  %s7, 16, %s572, [#allocation12]
        $region44: #{graphgps_forward.1} parent=11 // pred_fallthru
          _
      $region12: #{graphgps_forward.1} parent=5 // pred_fallthru
        _
      %p575 = scmp.lt.s32.totalorder %s29, 2
      // Predicated region
      $region45: #{graphgps_forward.1} parent=5 // pred_check
        %p576 = pneg %p575
      $region46: #{graphgps_forward.1} parent=5 // pred_check_branch
        %578 = sbr.rel (%p576) target = $region48
      $region47: #{graphgps_forward.1} parent=5 // pred_region
        // Predicated region
        $region49: #{graphgps_forward.1} parent=47 // pred_check
          %p579 = pneg %p217
        $region50: #{graphgps_forward.1} parent=47 // pred_check_branch
          %581 = sbr.rel (%p579) target = $region52
        $region51: #{graphgps_forward.1} parent=47 // pred_region
          %p582 = scmp.lt.s32.totalorder %s29, 1
          %s583 = scalar_select %p582, %s29, 1
          %s584 = smul.addr %s583, 4
          %s585 = smul.addr %s584, 4
          %s586 = scalar_lea.vmem %s8, %s585
        $region52: #{graphgps_forward.1} parent=47 // pred_fallthru
          _
        // Predicated region
        $region53: #{graphgps_forward.1} parent=47 // pred_check
          %p587 = pneg %p243
        $region54: #{graphgps_forward.1} parent=47 // pred_check_branch
          %589 = sbr.rel (%p587) target = $region56
        $region55: #{graphgps_forward.1} parent=47 // pred_region
          %p590 = scmp.lt.s32.totalorder %s29, 1
          %s591 = scalar_select %p590, %s29, 1
          %s592 = scalar_lea.vmem %s9, %s591
        $region56: #{graphgps_forward.1} parent=47 // pred_fallthru
          _
        // Predicated region
        $region57: #{graphgps_forward.1} parent=47 // pred_check
          %p593 = pneg %p269
        $region58: #{graphgps_forward.1} parent=47 // pred_check_branch
          %595 = sbr.rel (%p593) target = $region60
        $region59: #{graphgps_forward.1} parent=47 // pred_region
          %p596 = scmp.lt.s32.totalorder %s29, 1
          %s597 = scalar_select %p596, %s29, 1
          %s598 = smul.addr %s597, 4
          %s599 = smul.addr %s598, 4
          %s600 = scalar_lea.vmem %s10, %s599
        $region60: #{graphgps_forward.1} parent=47 // pred_fallthru
          _
        // Predicated region
        $region61: #{graphgps_forward.1} parent=47 // pred_check
          %p601 = pneg %p295
        $region62: #{graphgps_forward.1} parent=47 // pred_check_branch
          %603 = sbr.rel (%p601) target = $region64
        $region63: #{graphgps_forward.1} parent=47 // pred_region
          %s604 = sand.u32 %s29, 1
          %s605 = scalar_lea.sflag [#allocation6], %s604
          %s606 = sand.u32 %s285, 1
          %s607 = scalar_lea.vmem [#allocation13], %s606
          %s609 = ssub.s32 16, 16
          %610 = vsyncadd %s605, %s609
          %s611 = smul.addr %s29, 16
          %s612 = scalar_lea.hbm %s11, %s611
          %s614 = sshll.u32 %s607, 4
          %s615 = int_to_ptr.vmem [resolvable:$true] %s614
          %617 = dma.hbm_to_vmem [thread:$0]  %s612, 16, %s615, %s605
        $region64: #{graphgps_forward.1} parent=47 // pred_fallthru
          _
        // Predicated region
        $region65: #{graphgps_forward.1} parent=47 // pred_check
          %p618 = pneg %p321
        $region66: #{graphgps_forward.1} parent=47 // pred_check_branch
          %620 = sbr.rel (%p618) target = $region68
        $region67: #{graphgps_forward.1} parent=47 // pred_region
          %p621 = scmp.lt.s32.totalorder %s29, 1
          %s622 = scalar_select %p621, %s29, 1
          %s623 = smul.addr %s622, 16
          %s624 = smul.addr %s623, 4
          %s625 = scalar_lea.vmem %s12, %s624
        $region68: #{graphgps_forward.1} parent=47 // pred_fallthru
          _
        // Predicated region
        $region69: #{graphgps_forward.1} parent=47 // pred_check
          %p626 = pneg %p347
        $region70: #{graphgps_forward.1} parent=47 // pred_check_branch
          %628 = sbr.rel (%p626) target = $region72
        $region71: #{graphgps_forward.1} parent=47 // pred_region
          %s629 = sand.u32 %s29, 1
          %s630 = scalar_lea.sflag [#allocation6], %s629
          %s631 = sand.u32 %s337, 1
          %s632 = smul.addr %s631, 4
          %s633 = scalar_lea.vmem [#allocation14], %s632
          %s635 = ssub.s32 64, 64
          %636 = vsyncadd %s630, %s635
          %s637 = smul.addr %s29, 4
          %s638 = smul.addr %s637, 16
          %s639 = scalar_lea.hbm %s13, %s638
          %s640 = sshll.u32 %s633, 4
          %s641 = int_to_ptr.vmem [resolvable:$true] %s640
          %646 = dma.hbm_to_vmem [thread:$0]  %s639, 64, %s641, %s630, 16, 16, 1
        $region72: #{graphgps_forward.1} parent=47 // pred_fallthru
          _
        // Predicated region
        $region73: #{graphgps_forward.1} parent=47 // pred_check
          %p647 = pneg %p373
        $region74: #{graphgps_forward.1} parent=47 // pred_check_branch
          %649 = sbr.rel (%p647) target = $region76
        $region75: #{graphgps_forward.1} parent=47 // pred_region
          %s650 = sand.u32 %s29, 1
          %s651 = scalar_lea.sflag [#allocation6], %s650
          %s652 = sand.u32 %s363, 1
          %s653 = scalar_lea.vmem [#allocation15], %s652
          %s655 = ssub.s32 16, 16
          %656 = vsyncadd %s651, %s655
          %s657 = smul.addr %s29, 16
          %s658 = scalar_lea.hbm %s14, %s657
          %s660 = sshll.u32 %s653, 4
          %s661 = int_to_ptr.vmem [resolvable:$true] %s660
          %663 = dma.hbm_to_vmem [thread:$0]  %s658, 16, %s661, %s651
        $region76: #{graphgps_forward.1} parent=47 // pred_fallthru
          _
        // Predicated region
        $region77: #{graphgps_forward.1} parent=47 // pred_check
          %p664 = pneg %p399
        $region78: #{graphgps_forward.1} parent=47 // pred_check_branch
          %666 = sbr.rel (%p664) target = $region80
        $region79: #{graphgps_forward.1} parent=47 // pred_region
          %s667 = sand.u32 %s29, 1
          %s668 = scalar_lea.sflag [#allocation6], %s667
          %s669 = sand.u32 %s389, 1
          %s670 = smul.addr %s669, 16
          %s671 = scalar_lea.vmem [#allocation16], %s670
          %s673 = ssub.s32 256, 256
          %674 = vsyncadd %s668, %s673
          %s675 = smul.addr %s29, 4
          %s676 = smul.addr %s675, 64
          %s677 = scalar_lea.hbm %s15, %s676
          %s678 = sshll.u32 %s671, 4
          %s679 = int_to_ptr.vmem [resolvable:$true] %s678
          %684 = dma.hbm_to_vmem [thread:$0]  %s677, 256, %s679, %s668, 64, 64, 4
        $region80: #{graphgps_forward.1} parent=47 // pred_fallthru
          _
        // Predicated region
        $region81: #{graphgps_forward.1} parent=47 // pred_check
          %p685 = pneg %p425
        $region82: #{graphgps_forward.1} parent=47 // pred_check_branch
          %687 = sbr.rel (%p685) target = $region84
        $region83: #{graphgps_forward.1} parent=47 // pred_region
          %s688 = sand.u32 %s29, 1
          %s689 = scalar_lea.sflag [#allocation6], %s688
          %s690 = sand.u32 %s415, 1
          %s691 = scalar_lea.vmem [#allocation17], %s690
          %s693 = ssub.s32 16, 16
          %694 = vsyncadd %s689, %s693
          %s695 = smul.addr %s29, 16
          %s696 = scalar_lea.hbm %s16, %s695
          %s698 = sshll.u32 %s691, 4
          %s699 = int_to_ptr.vmem [resolvable:$true] %s698
          %701 = dma.hbm_to_vmem [thread:$0]  %s696, 16, %s699, %s689
        $region84: #{graphgps_forward.1} parent=47 // pred_fallthru
          _
        // Predicated region
        $region85: #{graphgps_forward.1} parent=47 // pred_check
          %p702 = pneg %p451
        $region86: #{graphgps_forward.1} parent=47 // pred_check_branch
          %704 = sbr.rel (%p702) target = $region88
        $region87: #{graphgps_forward.1} parent=47 // pred_region
          %p705 = scmp.lt.s32.totalorder %s29, 1
          %s706 = scalar_select %p705, %s29, 1
          %s707 = smul.addr %s706, 8
          %s708 = smul.addr %s707, 4
          %s709 = scalar_lea.vmem %s17, %s708
        $region88: #{graphgps_forward.1} parent=47 // pred_fallthru
          _
        // Predicated region
        $region89: #{graphgps_forward.1} parent=47 // pred_check
          %p710 = pneg %p477
        $region90: #{graphgps_forward.1} parent=47 // pred_check_branch
          %712 = sbr.rel (%p710) target = $region92
        $region91: #{graphgps_forward.1} parent=47 // pred_region
          %s713 = sand.u32 %s29, 1
          %s714 = scalar_lea.sflag [#allocation6], %s713
          %s715 = sand.u32 %s467, 1
          %s716 = scalar_lea.vmem [#allocation18], %s715
          %s718 = ssub.s32 16, 16
          %719 = vsyncadd %s714, %s718
          %s720 = smul.addr %s29, 16
          %s721 = scalar_lea.hbm %s18, %s720
          %s723 = sshll.u32 %s716, 4
          %s724 = int_to_ptr.vmem [resolvable:$true] %s723
          %726 = dma.hbm_to_vmem [thread:$0]  %s721, 16, %s724, %s714
        $region92: #{graphgps_forward.1} parent=47 // pred_fallthru
          _
      $region48: #{graphgps_forward.1} parent=5 // pred_fallthru
        _
      %p727 = scmp.le.s32.totalorder 1, %s29
      %p728 = scmp.lt.s32.totalorder %s29, 3
      %p729 = pnand %p727, %p728
      %p730 = pneg %p729
      // Predicated region
      $region93: #{graphgps_forward.1} parent=5 // pred_check
        _
      $region94: #{graphgps_forward.1} parent=5 // pred_check_branch
        %732 = sbr.rel (%p729) target = $region96
      $region95: #{graphgps_forward.1} parent=5 // pred_region
        %s733 = ssub.s32 %s29, 1
        // Predicated region
        $region97: #{graphgps_forward.1} parent=95 // pred_check
          %p734 = pneg %p134
        $region98: #{graphgps_forward.1} parent=95 // pred_check_branch
          %736 = sbr.rel (%p734) target = $region100
        $region99: #{graphgps_forward.1} parent=95 // pred_region
          %737 = dma.done [#allocation6], 64
        $region100: #{graphgps_forward.1} parent=95 // pred_fallthru
          _
        // Predicated region
        $region101: #{graphgps_forward.1} parent=95 // pred_check
          %p738 = pneg %p155
        $region102: #{graphgps_forward.1} parent=95 // pred_check_branch
          %740 = sbr.rel (%p738) target = $region104
        $region103: #{graphgps_forward.1} parent=95 // pred_region
          %741 = dma.done [#allocation9], 16
        $region104: #{graphgps_forward.1} parent=95 // pred_fallthru
          _
        // Predicated region
        $region105: #{graphgps_forward.1} parent=95 // pred_check
          %p742 = pneg %p176
        $region106: #{graphgps_forward.1} parent=95 // pred_check_branch
          %744 = sbr.rel (%p742) target = $region108
        $region107: #{graphgps_forward.1} parent=95 // pred_region
          %745 = dma.done [#allocation9], 16
        $region108: #{graphgps_forward.1} parent=95 // pred_fallthru
          _
        // Predicated region
        $region109: #{graphgps_forward.1} parent=95 // pred_check
          %p746 = pneg %p197
        $region110: #{graphgps_forward.1} parent=95 // pred_check_branch
          %748 = sbr.rel (%p746) target = $region112
        $region111: #{graphgps_forward.1} parent=95 // pred_region
          %749 = dma.done [#allocation12], 16
        $region112: #{graphgps_forward.1} parent=95 // pred_fallthru
          _
        %s750 = sand.u32 %s34, 1
        %s751 = scalar_lea.sflag [#allocation6], %s750
        %s752 = sand.u32 %s288, 1
        %s753 = scalar_lea.vmem [#allocation13], %s752
        // Predicated region
        $region113: #{graphgps_forward.1} parent=95 // pred_check
          %p754 = pneg %p301
        $region114: #{graphgps_forward.1} parent=95 // pred_check_branch
          %756 = sbr.rel (%p754) target = $region116
        $region115: #{graphgps_forward.1} parent=95 // pred_region
          %757 = dma.done %s751, 16
        $region116: #{graphgps_forward.1} parent=95 // pred_fallthru
          _
        %s758 = sand.u32 %s34, 1
        %s759 = scalar_lea.sflag [#allocation6], %s758
        %s760 = sand.u32 %s340, 1
        %s761 = smul.addr %s760, 4
        %s762 = scalar_lea.vmem [#allocation14], %s761
        // Predicated region
        $region117: #{graphgps_forward.1} parent=95 // pred_check
          %p763 = pneg %p353
        $region118: #{graphgps_forward.1} parent=95 // pred_check_branch
          %765 = sbr.rel (%p763) target = $region120
        $region119: #{graphgps_forward.1} parent=95 // pred_region
          %766 = dma.done %s759, 64
        $region120: #{graphgps_forward.1} parent=95 // pred_fallthru
          _
        %s767 = sand.u32 %s34, 1
        %s768 = scalar_lea.sflag [#allocation6], %s767
        %s769 = sand.u32 %s366, 1
        %s770 = scalar_lea.vmem [#allocation15], %s769
        // Predicated region
        $region121: #{graphgps_forward.1} parent=95 // pred_check
          %p771 = pneg %p379
        $region122: #{graphgps_forward.1} parent=95 // pred_check_branch
          %773 = sbr.rel (%p771) target = $region124
        $region123: #{graphgps_forward.1} parent=95 // pred_region
          %774 = dma.done %s768, 16
        $region124: #{graphgps_forward.1} parent=95 // pred_fallthru
          _
        %s775 = sand.u32 %s34, 1
        %s776 = scalar_lea.sflag [#allocation6], %s775
        %s777 = sand.u32 %s392, 1
        %s778 = smul.addr %s777, 16
        %s779 = scalar_lea.vmem [#allocation16], %s778
        // Predicated region
        $region125: #{graphgps_forward.1} parent=95 // pred_check
          %p780 = pneg %p405
        $region126: #{graphgps_forward.1} parent=95 // pred_check_branch
          %782 = sbr.rel (%p780) target = $region128
        $region127: #{graphgps_forward.1} parent=95 // pred_region
          %783 = dma.done %s776, 256
        $region128: #{graphgps_forward.1} parent=95 // pred_fallthru
          _
        %s784 = sand.u32 %s34, 1
        %s785 = scalar_lea.sflag [#allocation6], %s784
        %s786 = sand.u32 %s418, 1
        %s787 = scalar_lea.vmem [#allocation17], %s786
        // Predicated region
        $region129: #{graphgps_forward.1} parent=95 // pred_check
          %p788 = pneg %p431
        $region130: #{graphgps_forward.1} parent=95 // pred_check_branch
          %790 = sbr.rel (%p788) target = $region132
        $region131: #{graphgps_forward.1} parent=95 // pred_region
          %791 = dma.done %s785, 16
        $region132: #{graphgps_forward.1} parent=95 // pred_fallthru
          _
        %s792 = sand.u32 %s34, 1
        %s793 = scalar_lea.sflag [#allocation6], %s792
        %s794 = sand.u32 %s470, 1
        %s795 = scalar_lea.vmem [#allocation18], %s794
        // Predicated region
        $region133: #{graphgps_forward.1} parent=95 // pred_check
          %p796 = pneg %p483
        $region134: #{graphgps_forward.1} parent=95 // pred_check_branch
          %798 = sbr.rel (%p796) target = $region136
        $region135: #{graphgps_forward.1} parent=95 // pred_region
          %799 = dma.done %s793, 16
        $region136: #{graphgps_forward.1} parent=95 // pred_fallthru
          _
        %p800 = pneg %p50
        %p801 = pneg %p47
        %p802 = pneg %p71
        %p803 = pneg %p68
        %p804 = pneg %p92
        %p805 = pneg %p89
        %p806 = pneg %p113
        %p807 = pneg %p110
        %p808 = pneg %p134
        %p809 = pneg %p131
        %p810 = pneg %p155
        %p811 = pneg %p152
        %p812 = pneg %p176
        %p813 = pneg %p173
        %p814 = pneg %p197
        %p815 = pneg %p194
        %p816 = scmp.lt.s32.totalorder %s34, 1
        %s817 = scalar_select %p816, %s34, 1
        %s818 = smul.addr %s817, 4
        %s819 = smul.addr %s818, 4
        %s820 = scalar_lea.vmem %s8, %s819
        %p821 = pneg %p223
        %p822 = pneg %p220
        %p823 = scmp.lt.s32.totalorder %s34, 1
        %s824 = scalar_select %p823, %s34, 1
        %s825 = scalar_lea.vmem %s9, %s824
        %p826 = pneg %p249
        %p827 = pneg %p246
        %p828 = scmp.lt.s32.totalorder %s34, 1
        %s829 = scalar_select %p828, %s34, 1
        %s830 = smul.addr %s829, 4
        %s831 = smul.addr %s830, 4
        %s832 = scalar_lea.vmem %s10, %s831
        %p833 = pneg %p275
        %p834 = pneg %p272
        %s835 = sand.u32 %s34, 1
        %s836 = scalar_lea.sflag [#allocation6], %s835
        %s837 = sand.u32 %s288, 1
        %s838 = scalar_lea.vmem [#allocation13], %s837
        %p839 = pneg %p301
        %p840 = pneg %p298
        %p841 = scmp.lt.s32.totalorder %s34, 1
        %s842 = scalar_select %p841, %s34, 1
        %s843 = smul.addr %s842, 16
        %s844 = smul.addr %s843, 4
        %s845 = scalar_lea.vmem %s12, %s844
        %p846 = pneg %p327
        %p847 = pneg %p324
        %s848 = sand.u32 %s34, 1
        %s849 = scalar_lea.sflag [#allocation6], %s848
        %s850 = sand.u32 %s340, 1
        %s851 = smul.addr %s850, 4
        %s852 = scalar_lea.vmem [#allocation14], %s851
        %p853 = pneg %p353
        %p854 = pneg %p350
        %s855 = sand.u32 %s34, 1
        %s856 = scalar_lea.sflag [#allocation6], %s855
        %s857 = sand.u32 %s366, 1
        %s858 = scalar_lea.vmem [#allocation15], %s857
        %p859 = pneg %p379
        %p860 = pneg %p376
        %s861 = sand.u32 %s34, 1
        %s862 = scalar_lea.sflag [#allocation6], %s861
        %s863 = sand.u32 %s392, 1
        %s864 = smul.addr %s863, 16
        %s865 = scalar_lea.vmem [#allocation16], %s864
        %p866 = pneg %p405
        %p867 = pneg %p402
        %s868 = sand.u32 %s34, 1
        %s869 = scalar_lea.sflag [#allocation6], %s868
        %s870 = sand.u32 %s418, 1
        %s871 = scalar_lea.vmem [#allocation17], %s870
        %p872 = pneg %p431
        %p873 = pneg %p428
        %p874 = scmp.lt.s32.totalorder %s34, 1
        %s875 = scalar_select %p874, %s34, 1
        %s876 = smul.addr %s875, 8
        %s877 = smul.addr %s876, 4
        %s878 = scalar_lea.vmem %s17, %s877
        %p879 = pneg %p457
        %p880 = pneg %p454
        %s881 = sand.u32 %s34, 1
        %s882 = scalar_lea.sflag [#allocation6], %s881
        %s883 = sand.u32 %s470, 1
        %s884 = scalar_lea.vmem [#allocation18], %s883
        %p885 = pneg %p483
        %p886 = pneg %p480
        %p887 = pneg %p504
        %p888 = pneg %p501
        %p889 = scmp.lt.s32.totalorder %s34, 1
        %s890 = scalar_select %p889, %s34, 1
        %s891 = smul.addr %s890, 4
        %s892 = smul.addr %s891, 4
        %s893 = scalar_lea.vmem %s8, %s892
        %p894 = scmp.lt.s32.totalorder %s34, 1
        %s895 = scalar_select %p894, %s34, 1
        %s896 = scalar_lea.vmem %s9, %s895
        %p897 = scmp.lt.s32.totalorder %s34, 1
        %s898 = scalar_select %p897, %s34, 1
        %s899 = smul.addr %s898, 4
        %s900 = smul.addr %s899, 4
        %s901 = scalar_lea.vmem %s10, %s900
        %p902 = scmp.lt.s32.totalorder %s34, 1
        %s903 = scalar_select %p902, %s34, 1
        %s904 = smul.addr %s903, 16
        %s905 = smul.addr %s904, 4
        %s906 = scalar_lea.vmem %s12, %s905
        %p907 = scmp.lt.s32.totalorder %s34, 1
        %s908 = scalar_select %p907, %s34, 1
        %s909 = smul.addr %s908, 8
        %s910 = smul.addr %s909, 4
        %s911 = scalar_lea.vmem %s17, %s910
        %p913 = scmp.eq.s32.totalorder %s34, 0
        // Predicated region
        $region137: #{graphgps_forward.1} parent=95 // pred_check
          %p914 = pneg %p913
        $region138: #{graphgps_forward.1} parent=95 // pred_check_branch
          %916 = sbr.rel (%p914) target = $region140
        $region139: #{graphgps_forward.1} parent=95 // pred_region
          %v917 = vld [vmem:[%s0] sm:$0xff]
          %v918 = vpack.c.bf16 %v917, %v917
          %v919 = vld [vmem:[#allocation5] sm:$0x7]
          %v920 = vld [vmem:[#allocation8] sm:$0x1]
          %v922 = vlaneseq
          %v923 = vshrl.u32 %v922, 7
          %v924 = vsub.s32 0, %v923
          %v925 = vrot.slane %v920, %v924
          %vm927 = vcmask 48128
          %v929 = vsel %vm927, %v918, 0
          %vm931 = vcmask 1042432
          %v933 = vsel %vm931, %v919, 0
          %935 = vmatprep.subr.bf16.mxu0 0
          %936 = vmatpush1.bf16.msra.mxu0 %v933
          %937 = vmatprep.subr.bf16.mxu0 0
          %938 = vmatpush1.bf16.msra.mxu0 0
          %939 = vmatprep.subr.bf16.mxu0 0
          %940 = vmatpush1.bf16.msra.mxu0 0
          %941 = vmatprep.subr.bf16.mxu0 0
          %942 = vmatpush1.bf16.msra.mxu0 0
          %943 = vmatprep.subr.bf16.mxu0 0
          %944 = vmatpush1.bf16.msra.mxu0 0
          %945 = vmatprep.subr.bf16.mxu0 0
          %946 = vmatpush1.bf16.msra.mxu0 0
          %947 = vmatprep.subr.bf16.mxu0 0
          %948 = vmatpush1.bf16.msra.mxu0 0
          %949 = vmatprep.subr.bf16.mxu0 0
          %950 = vmatpush1.bf16.msra.mxu0 0
          %951 = vmatprep.subr.bf16.mxu0 0
          %952 = vmatpush1.bf16.msra.mxu0 0
          %953 = vmatprep.subr.bf16.mxu0 0
          %954 = vmatpush1.bf16.msra.mxu0 0
          %955 = vmatprep.subr.bf16.mxu0 0
          %956 = vmatpush1.bf16.msra.mxu0 0
          %957 = vmatprep.subr.bf16.mxu0 0
          %958 = vmatpush1.bf16.msra.mxu0 0
          %959 = vmatprep.subr.bf16.mxu0 0
          %960 = vmatpush1.bf16.msra.mxu0 0
          %961 = vmatprep.subr.bf16.mxu0 0
          %962 = vmatpush1.bf16.msra.mxu0 0
          %963 = vmatprep.subr.bf16.mxu0 0
          %964 = vmatpush1.bf16.msra.mxu0 0
          %965 = vmatprep.subr.bf16.mxu0 0
          %966 = vmatpush1.bf16.msra.mxu0 0
          %967 = vmatprep.mubr.bf16.mxu0 0
          %968 = vmatmul.mubr.bf16.gmra.mrb[0].mxu0 %v929
          %v969 = vpop.f32.mrb[0].mxu0
          %v970 = vadd.f32 %v925, %v969
          %v971 = vpop.f32.mrb[0].mxu0
          %v972 = vpop.f32.mrb[0].mxu0
          %v973 = vpop.f32.mrb[0].mxu0
          %974 = vdwg.mxu0
          %vm975 = vcmask 261120
          %976 = vst.msk [vmem:[#allocation19] sm:$0xff] %vm975, %v970
          %v977 = vld [vmem:[%s3] sm:$0xff]
          %v978 = vld [vmem:[%s3 + $0x8] sm:$0xff]
          %v979 = vld [vmem:[#allocation10] sm:$0x1]
          %981 = vset.pattern.permute.xlu0 0
          %982 = vperm.xlu0 %981, %v977
          %v983 = vpop.permute.xlu0 %982
          %986 = vset.pattern.permute.xlu0 0
          %987 = vperm.xlu0 %986, %v978
          %v988 = vpop.permute.xlu0 %987
          %v991 = vlaneseq
          %v992 = vshrl.u32 %v991, 7
          %v993 = vsub.s32 0, %v992
          %v994 = vrot.slane %v979, %v993
          %v996 = vmul.f32 %v983, %v994
          %v997 = vmul.f32 %v988, %v994
          %v998 = vld [vmem:[#allocation11] sm:$0x1]
          %v1000 = vlaneseq
          %v1001 = vshrl.u32 %v1000, 7
          %v1002 = vsub.s32 0, %v1001
          %v1003 = vrot.slane %v998, %v1002
          %v1005 = vadd.f32 %v996, %v1003
          %v1006 = vadd.f32 %v997, %v1003
          %1007 = vst.msk [vmem:[#allocation4] sm:$0xff] %vm975, %v1005
          %1008 = vst.msk [vmem:[#allocation4 + $0x8] sm:$0xff] %vm975, %v1006
          %v1009 = vlaneseq
          %v1010 = vand.u32 %v1009, 127
          %v1011 = vld [vmem:[%s1] sm:$0xff]
          %v1012 = vld [vmem:[%s1 + $0x8] sm:$0xff]
          %1013 = vset.pattern.permute.xlu0 0
          %1014 = vperm.xlu0 %1013, %v1011
          %v1015 = vpop.permute.xlu0 %1014
          %1016 = vset.pattern.permute.xlu0 0
          %1017 = vperm.xlu0 %1016, %v1012
          %v1018 = vpop.permute.xlu0 %1017
          %vm1019 = vcmp.eq.s32.totalorder %v1010, %v1015
          %vm1020 = vcmp.eq.s32.totalorder %v1010, %v1018
          %v1021 = vsel %vm1019, 1, 0
          %v1022 = vsel %vm1020, 1, 0
          %v1023 = vcvt.s32.f32 %v1021
          %v1024 = vcvt.s32.f32 %v1022
          %vm1025 = vcmask 64512
          %1026 = vst.msk [vmem:[#allocation2] sm:$0xff] %vm1025, %v1023
          %1027 = vst.msk [vmem:[#allocation2 + $0x8] sm:$0xff] %vm1025, %v1024
          %v1028 = vlaneseq
          %v1029 = vshrl.u32 %v1028, 7
          %v1030 = vld [vmem:[%s2] sm:$0x1]
          %v1031 = vlaneseq
          %v1032 = vshrl.u32 %v1031, 7
          %v1033 = vsub.s32 0, %v1032
          %v1034 = vrot.slane %v1030, %v1033
          %vm1035 = vcmp.eq.s32.totalorder %v1029, %v1034
          %v1036 = vsel %vm1035, 1, 0
          %v1037 = vcvt.s32.f32 %v1036
          %vm1038 = vcmask 130048
          %1039 = vst.msk [vmem:[#allocation3] sm:$0xff] %vm1038, %v1037
        $region140: #{graphgps_forward.1} parent=95 // pred_fallthru
          _
        %v1040 = vld [vmem:[#allocation19] sm:$0xff]
        %v1041 = vld [vmem:[#allocation2] sm:$0xff]
        %v1042 = vld [vmem:[#allocation2 + $0x8] sm:$0xff]
        %v1043 = vld [vmem:[#allocation4] sm:$0xff]
        %v1044 = vld [vmem:[#allocation4 + $0x8] sm:$0xff]
        %vm1045 = vcmask 64512
        %v1047 = vsel %vm1045, %v1041, 0
        %v1050 = vsel %vm1045, %v1042, 0
        %1052 = vmatprep.subr.mxu0 0.0
        %1053 = vmatpush1.msra.mxu0 %v1040
        %1054 = vmatprep.subr.mxu0 0.0
        %1055 = vmatpush1.msra.mxu0 0.0
        %1056 = vmatprep.subr.mxu0 0.0
        %1057 = vmatpush1.msra.mxu0 0.0
        %1058 = vmatprep.subr.mxu0 0.0
        %1059 = vmatpush1.msra.mxu0 0.0
        %1060 = vmatprep.subr.mxu0 0.0
        %1061 = vmatpush1.msra.mxu0 0.0
        %1062 = vmatprep.subr.mxu0 0.0
        %1063 = vmatpush1.msra.mxu0 0.0
        %1064 = vmatprep.subr.mxu0 0.0
        %1065 = vmatpush1.msra.mxu0 0.0
        %1066 = vmatprep.subr.mxu0 0.0
        %1067 = vmatpush1.msra.mxu0 0.0
        %1068 = vmatprep.subr.mxu0 0.0
        %1069 = vmatpush1.msra.mxu0 0.0
        %1070 = vmatprep.subr.mxu0 0.0
        %1071 = vmatpush1.msra.mxu0 0.0
        %1072 = vmatprep.subr.mxu0 0.0
        %1073 = vmatpush1.msra.mxu0 0.0
        %1074 = vmatprep.subr.mxu0 0.0
        %1075 = vmatpush1.msra.mxu0 0.0
        %1076 = vmatprep.subr.mxu0 0.0
        %1077 = vmatpush1.msra.mxu0 0.0
        %1078 = vmatprep.subr.mxu0 0.0
        %1079 = vmatpush1.msra.mxu0 0.0
        %1080 = vmatprep.subr.mxu0 0.0
        %1081 = vmatpush1.msra.mxu0 0.0
        %1082 = vmatprep.subr.mxu0 0.0
        %1083 = vmatpush1.msra.mxu0 0.0
        %1084 = vmatprep.subr.mxu0 0.0
        %1085 = vmatpush1.msra.mxu0 0.0
        %1086 = vmatprep.subr.mxu0 0.0
        %1087 = vmatpush1.msra.mxu0 0.0
        %1088 = vmatprep.subr.mxu0 0.0
        %1089 = vmatpush1.msra.mxu0 0.0
        %1090 = vmatprep.subr.mxu0 0.0
        %1091 = vmatpush1.msra.mxu0 0.0
        %1092 = vmatprep.subr.mxu0 0.0
        %1093 = vmatpush1.msra.mxu0 0.0
        %1094 = vmatprep.subr.mxu0 0.0
        %1095 = vmatpush1.msra.mxu0 0.0
        %1096 = vmatprep.subr.mxu0 0.0
        %1097 = vmatpush1.msra.mxu0 0.0
        %1098 = vmatprep.subr.mxu0 0.0
        %1099 = vmatpush1.msra.mxu0 0.0
        %1100 = vmatprep.subr.mxu0 0.0
        %1101 = vmatpush1.msra.mxu0 0.0
        %1102 = vmatprep.subr.mxu0 0.0
        %1103 = vmatpush1.msra.mxu0 0.0
        %1104 = vmatprep.subr.mxu0 0.0
        %1105 = vmatpush1.msra.mxu0 0.0
        %1106 = vmatprep.subr.mxu0 0.0
        %1107 = vmatpush1.msra.mxu0 0.0
        %1108 = vmatprep.subr.mxu0 0.0
        %1109 = vmatpush1.msra.mxu0 0.0
        %1110 = vmatprep.subr.mxu0 0.0
        %1111 = vmatpush1.msra.mxu0 0.0
        %1112 = vmatprep.subr.mxu0 0.0
        %1113 = vmatpush1.msra.mxu0 0.0
        %1114 = vmatprep.subr.mxu0 0.0
        %1115 = vmatpush1.msra.mxu0 0.0
        %1116 = vmatprep.mubr.f32.mxu0 0.0
        %1117 = vmatmul.mubr.f32.gmra.mrb[0].mxu0 %v1047
        %v1118 = vpop.f32.mrb[0].mxu0
        %v1119 = vadd.f32 %v1043, %v1118
        %v1120 = vpop.f32.mrb[0].mxu0
        %1121 = vmatprep.mubr.f32.mxu0 0.0
        %1122 = vmatmul.mubr.f32.gmra.mrb[0].mxu0 %v1050
        %v1123 = vpop.f32.mrb[0].mxu0
        %v1124 = vadd.f32 %v1044, %v1123
        %v1125 = vpop.f32.mrb[0].mxu0
        %1126 = vdwg.mxu0
        %v1127 = vmax.f32 %v1119, 0.0
        %v1128 = vmax.f32 %v1124, 0.0
        %v1129 = vld [vmem:[#allocation3] sm:$0xff]
        %vm1130 = vcmask 130048
        %v1132 = vsel %vm1130, %v1129, 0
        %1134 = vmatprep.subr.mxu0 0.0
        %1135 = vmatpush1.msra.mxu0 %v1127
        %1136 = vmatprep.subr.mxu0 0.0
        %1137 = vmatpush1.msra.mxu0 %v1128
        %1138 = vmatprep.subr.mxu0 0.0
        %1139 = vmatpush1.msra.mxu0 0.0
        %1140 = vmatprep.subr.mxu0 0.0
        %1141 = vmatpush1.msra.mxu0 0.0
        %1142 = vmatprep.subr.mxu0 0.0
        %1143 = vmatpush1.msra.mxu0 0.0
        %1144 = vmatprep.subr.mxu0 0.0
        %1145 = vmatpush1.msra.mxu0 0.0
        %1146 = vmatprep.subr.mxu0 0.0
        %1147 = vmatpush1.msra.mxu0 0.0
        %1148 = vmatprep.subr.mxu0 0.0
        %1149 = vmatpush1.msra.mxu0 0.0
        %1150 = vmatprep.subr.mxu0 0.0
        %1151 = vmatpush1.msra.mxu0 0.0
        %1152 = vmatprep.subr.mxu0 0.0
        %1153 = vmatpush1.msra.mxu0 0.0
        %1154 = vmatprep.subr.mxu0 0.0
        %1155 = vmatpush1.msra.mxu0 0.0
        %1156 = vmatprep.subr.mxu0 0.0
        %1157 = vmatpush1.msra.mxu0 0.0
        %1158 = vmatprep.subr.mxu0 0.0
        %1159 = vmatpush1.msra.mxu0 0.0
        %1160 = vmatprep.subr.mxu0 0.0
        %1161 = vmatpush1.msra.mxu0 0.0
        %1162 = vmatprep.subr.mxu0 0.0
        %1163 = vmatpush1.msra.mxu0 0.0
        %1164 = vmatprep.subr.mxu0 0.0
        %1165 = vmatpush1.msra.mxu0 0.0
        %1166 = vmatprep.subr.mxu0 0.0
        %1167 = vmatpush1.msra.mxu0 0.0
        %1168 = vmatprep.subr.mxu0 0.0
        %1169 = vmatpush1.msra.mxu0 0.0
        %1170 = vmatprep.subr.mxu0 0.0
        %1171 = vmatpush1.msra.mxu0 0.0
        %1172 = vmatprep.subr.mxu0 0.0
        %1173 = vmatpush1.msra.mxu0 0.0
        %1174 = vmatprep.subr.mxu0 0.0
        %1175 = vmatpush1.msra.mxu0 0.0
        %1176 = vmatprep.subr.mxu0 0.0
        %1177 = vmatpush1.msra.mxu0 0.0
        %1178 = vmatprep.subr.mxu0 0.0
        %1179 = vmatpush1.msra.mxu0 0.0
        %1180 = vmatprep.subr.mxu0 0.0
        %1181 = vmatpush1.msra.mxu0 0.0
        %1182 = vmatprep.subr.mxu0 0.0
        %1183 = vmatpush1.msra.mxu0 0.0
        %1184 = vmatprep.subr.mxu0 0.0
        %1185 = vmatpush1.msra.mxu0 0.0
        %1186 = vmatprep.subr.mxu0 0.0
        %1187 = vmatpush1.msra.mxu0 0.0
        %1188 = vmatprep.subr.mxu0 0.0
        %1189 = vmatpush1.msra.mxu0 0.0
        %1190 = vmatprep.subr.mxu0 0.0
        %1191 = vmatpush1.msra.mxu0 0.0
        %1192 = vmatprep.subr.mxu0 0.0
        %1193 = vmatpush1.msra.mxu0 0.0
        %1194 = vmatprep.subr.mxu0 0.0
        %1195 = vmatpush1.msra.mxu0 0.0
        %1196 = vmatprep.subr.mxu0 0.0
        %1197 = vmatpush1.msra.mxu0 0.0
        %1198 = vmatprep.mubr.f32.mxu0 0.0
        %1199 = vmatmul.mubr.f32.gmra.mrb[0].mxu0 %v1132
        %v1200 = vpop.f32.mrb[0].mxu0
        %v1201 = vadd.f32 0.0, %v1200
        %v1202 = vpop.f32.mrb[0].mxu0
        %1203 = vdwg.mxu0
        %v1204 = vadd.f32 %v1040, %v1201
        %v1205 = vpack.c.bf16 %v1204, %v1204
        %v1206 = vld [vmem:[%s893] sm:$0xf]
        %v1207 = vld [vmem:[%s893 + $0x4] sm:$0xf]
        %v1208 = vld [vmem:[%s893 + $0x8] sm:$0xf]
        %v1209 = vld [vmem:[%s893 + $0xc] sm:$0xf]
        %v1210 = vld [vmem:[%s896] sm:$0x1]
        %v1212 = vlaneseq
        %v1213 = vshrl.u32 %v1212, 7
        %v1214 = vsub.s32 0, %v1213
        %v1215 = vrot.slane %v1210, %v1214
        %v1221 = vunpack.c.l.b16 %v1206
        %v1222 = vunpack.c.l.b16 %v1207
        %v1223 = vunpack.c.l.b16 %v1208
        %v1224 = vunpack.c.l.b16 %v1209
        %v1225 = vpack.c.b16 %v1222, %v1221
        %v1226 = vpack.c.b16 %v1224, %v1223
        %vm1229 = vcmask 261120
        %v1231 = vsel %vm1229, %v1205, 0
        %1233 = vmatprep.subr.bf16.mxu0 0
        %1234 = vmatpush1.bf16.msra.mxu0 %v1225
        %1235 = vmatprep.subr.bf16.mxu0 0
        %1236 = vmatpush1.bf16.msra.mxu0 %v1226
        %1237 = vmatprep.subr.bf16.mxu0 0
        %1238 = vmatpush1.bf16.msra.mxu0 0
        %1239 = vmatprep.subr.bf16.mxu0 0
        %1240 = vmatpush1.bf16.msra.mxu0 0
        %1241 = vmatprep.subr.bf16.mxu0 0
        %1242 = vmatpush1.bf16.msra.mxu0 0
        %1243 = vmatprep.subr.bf16.mxu0 0
        %1244 = vmatpush1.bf16.msra.mxu0 0
        %1245 = vmatprep.subr.bf16.mxu0 0
        %1246 = vmatpush1.bf16.msra.mxu0 0
        %1247 = vmatprep.subr.bf16.mxu0 0
        %1248 = vmatpush1.bf16.msra.mxu0 0
        %1249 = vmatprep.subr.bf16.mxu0 0
        %1250 = vmatpush1.bf16.msra.mxu0 0
        %1251 = vmatprep.subr.bf16.mxu0 0
        %1252 = vmatpush1.bf16.msra.mxu0 0
        %1253 = vmatprep.subr.bf16.mxu0 0
        %1254 = vmatpush1.bf16.msra.mxu0 0
        %1255 = vmatprep.subr.bf16.mxu0 0
        %1256 = vmatpush1.bf16.msra.mxu0 0
        %1257 = vmatprep.subr.bf16.mxu0 0
        %1258 = vmatpush1.bf16.msra.mxu0 0
        %1259 = vmatprep.subr.bf16.mxu0 0
        %1260 = vmatpush1.bf16.msra.mxu0 0
        %1261 = vmatprep.subr.bf16.mxu0 0
        %1262 = vmatpush1.bf16.msra.mxu0 0
        %1263 = vmatprep.subr.bf16.mxu0 0
        %1264 = vmatpush1.bf16.msra.mxu0 0
        %1265 = vmatprep.mubr.bf16.mxu0 0
        %1266 = vmatmul.mubr.bf16.gmra.mrb[0].mxu0 %v1231
        %v1267 = vpop.f32.mrb[0].mxu0
        %v1268 = vadd.f32 %v1215, %v1267
        %v1269 = vpop.f32.mrb[0].mxu0
        %v1270 = vpop.f32.mrb[0].mxu0
        %v1271 = vpop.f32.mrb[0].mxu0
        %1272 = vdwg.mxu0
        %v1273 = vmax.f32 %v1268, 0.0
        %v1274 = vpack.c.bf16 %v1273, %v1273
        %v1275 = vld [vmem:[%s901] sm:$0xf]
        %v1276 = vld [vmem:[%s901 + $0x4] sm:$0xf]
        %v1277 = vld [vmem:[%s901 + $0x8] sm:$0xf]
        %v1278 = vld [vmem:[%s901 + $0xc] sm:$0xf]
        %v1279 = vld [vmem:[%s753] sm:$0x1]
        %v1281 = vlaneseq
        %v1282 = vshrl.u32 %v1281, 7
        %v1283 = vsub.s32 0, %v1282
        %v1284 = vrot.slane %v1279, %v1283
        %v1290 = vunpack.c.l.b16 %v1275
        %v1291 = vunpack.c.l.b16 %v1276
        %v1292 = vunpack.c.l.b16 %v1277
        %v1293 = vunpack.c.l.b16 %v1278
        %v1294 = vpack.c.b16 %v1291, %v1290
        %v1295 = vpack.c.b16 %v1293, %v1292
        %v1299 = vsel %vm1229, %v1274, 0
        %1301 = vmatprep.subr.bf16.mxu0 0
        %1302 = vmatpush1.bf16.msra.mxu0 %v1294
        %1303 = vmatprep.subr.bf16.mxu0 0
        %1304 = vmatpush1.bf16.msra.mxu0 %v1295
        %1305 = vmatprep.subr.bf16.mxu0 0
        %1306 = vmatpush1.bf16.msra.mxu0 0
        %1307 = vmatprep.subr.bf16.mxu0 0
        %1308 = vmatpush1.bf16.msra.mxu0 0
        %1309 = vmatprep.subr.bf16.mxu0 0
        %1310 = vmatpush1.bf16.msra.mxu0 0
        %1311 = vmatprep.subr.bf16.mxu0 0
        %1312 = vmatpush1.bf16.msra.mxu0 0
        %1313 = vmatprep.subr.bf16.mxu0 0
        %1314 = vmatpush1.bf16.msra.mxu0 0
        %1315 = vmatprep.subr.bf16.mxu0 0
        %1316 = vmatpush1.bf16.msra.mxu0 0
        %1317 = vmatprep.subr.bf16.mxu0 0
        %1318 = vmatpush1.bf16.msra.mxu0 0
        %1319 = vmatprep.subr.bf16.mxu0 0
        %1320 = vmatpush1.bf16.msra.mxu0 0
        %1321 = vmatprep.subr.bf16.mxu0 0
        %1322 = vmatpush1.bf16.msra.mxu0 0
        %1323 = vmatprep.subr.bf16.mxu0 0
        %1324 = vmatpush1.bf16.msra.mxu0 0
        %1325 = vmatprep.subr.bf16.mxu0 0
        %1326 = vmatpush1.bf16.msra.mxu0 0
        %1327 = vmatprep.subr.bf16.mxu0 0
        %1328 = vmatpush1.bf16.msra.mxu0 0
        %1329 = vmatprep.subr.bf16.mxu0 0
        %1330 = vmatpush1.bf16.msra.mxu0 0
        %1331 = vmatprep.subr.bf16.mxu0 0
        %1332 = vmatpush1.bf16.msra.mxu0 0
        %1333 = vmatprep.mubr.bf16.mxu0 0
        %1334 = vmatmul.mubr.bf16.gmra.mrb[0].mxu0 %v1299
        %v1335 = vpop.f32.mrb[0].mxu0
        %v1336 = vadd.f32 %v1284, %v1335
        %v1337 = vpop.f32.mrb[0].mxu0
        %v1338 = vpop.f32.mrb[0].mxu0
        %v1339 = vpop.f32.mrb[0].mxu0
        %1340 = vdwg.mxu0
        %v1341 = vadd.f32 %v1336, %v1040
        %v1342 = vmul.f32 %v1341, 0.999995
        %v1343 = vpack.c.bf16 %v1040, %v1040
        %v1344 = vld [vmem:[%s906] sm:$0xf]
        %v1345 = vld [vmem:[%s906 + $0x4] sm:$0xf]
        %v1346 = vld [vmem:[%s906 + $0x8] sm:$0xf]
        %v1347 = vld [vmem:[%s906 + $0xc] sm:$0xf]
        %v1348 = vld [vmem:[%s906 + $0x10] sm:$0xf]
        %v1349 = vld [vmem:[%s906 + $0x14] sm:$0xf]
        %v1350 = vld [vmem:[%s906 + $0x18] sm:$0xf]
        %v1351 = vld [vmem:[%s906 + $0x1c] sm:$0xf]
        %v1352 = vld [vmem:[%s906 + $0x20] sm:$0xf]
        %v1353 = vld [vmem:[%s906 + $0x24] sm:$0xf]
        %v1354 = vld [vmem:[%s906 + $0x28] sm:$0xf]
        %v1355 = vld [vmem:[%s906 + $0x2c] sm:$0xf]
        %v1356 = vld [vmem:[%s906 + $0x30] sm:$0xf]
        %v1357 = vld [vmem:[%s906 + $0x34] sm:$0xf]
        %v1358 = vld [vmem:[%s906 + $0x38] sm:$0xf]
        %v1359 = vld [vmem:[%s906 + $0x3c] sm:$0xf]
        %v1360 = vld [vmem:[%s762] sm:$0x1]
        %v1361 = vld [vmem:[%s762 + $0x1] sm:$0x1]
        %v1362 = vld [vmem:[%s762 + $0x2] sm:$0x1]
        %v1363 = vld [vmem:[%s762 + $0x3] sm:$0x1]
        %v1368 = vlaneseq
        %v1369 = vshrl.u32 %v1368, 7
        %v1370 = vsub.s32 0, %v1369
        %v1371 = vrot.slane %v1360, %v1370
        %v1372 = vlaneseq
        %v1373 = vshrl.u32 %v1372, 7
        %v1374 = vsub.s32 0, %v1373
        %v1375 = vrot.slane %v1361, %v1374
        %v1376 = vlaneseq
        %v1377 = vshrl.u32 %v1376, 7
        %v1378 = vsub.s32 0, %v1377
        %v1379 = vrot.slane %v1362, %v1378
        %v1380 = vlaneseq
        %v1381 = vshrl.u32 %v1380, 7
        %v1382 = vsub.s32 0, %v1381
        %v1383 = vrot.slane %v1363, %v1382
        %v1392 = vunpack.c.l.b16 %v1344
        %v1393 = vunpack.c.l.b16 %v1345
        %v1394 = vunpack.c.l.b16 %v1346
        %v1395 = vunpack.c.l.b16 %v1347
        %v1396 = vpack.c.b16 %v1393, %v1392
        %v1397 = vpack.c.b16 %v1395, %v1394
        %v1401 = vsel %vm1229, %v1343, 0
        %1403 = vmatprep.subr.bf16.mxu0 0
        %1404 = vmatpush1.bf16.msra.mxu0 %v1396
        %1405 = vmatprep.subr.bf16.mxu0 0
        %1406 = vmatpush1.bf16.msra.mxu0 %v1397
        %1407 = vmatprep.subr.bf16.mxu0 0
        %1408 = vmatpush1.bf16.msra.mxu0 0
        %1409 = vmatprep.subr.bf16.mxu0 0
        %1410 = vmatpush1.bf16.msra.mxu0 0
        %1411 = vmatprep.subr.bf16.mxu0 0
        %1412 = vmatpush1.bf16.msra.mxu0 0
        %1413 = vmatprep.subr.bf16.mxu0 0
        %1414 = vmatpush1.bf16.msra.mxu0 0
        %1415 = vmatprep.subr.bf16.mxu0 0
        %1416 = vmatpush1.bf16.msra.mxu0 0
        %1417 = vmatprep.subr.bf16.mxu0 0
        %1418 = vmatpush1.bf16.msra.mxu0 0
        %1419 = vmatprep.subr.bf16.mxu0 0
        %1420 = vmatpush1.bf16.msra.mxu0 0
        %1421 = vmatprep.subr.bf16.mxu0 0
        %1422 = vmatpush1.bf16.msra.mxu0 0
        %1423 = vmatprep.subr.bf16.mxu0 0
        %1424 = vmatpush1.bf16.msra.mxu0 0
        %1425 = vmatprep.subr.bf16.mxu0 0
        %1426 = vmatpush1.bf16.msra.mxu0 0
        %1427 = vmatprep.subr.bf16.mxu0 0
        %1428 = vmatpush1.bf16.msra.mxu0 0
        %1429 = vmatprep.subr.bf16.mxu0 0
        %1430 = vmatpush1.bf16.msra.mxu0 0
        %1431 = vmatprep.subr.bf16.mxu0 0
        %1432 = vmatpush1.bf16.msra.mxu0 0
        %1433 = vmatprep.subr.bf16.mxu0 0
        %1434 = vmatpush1.bf16.msra.mxu0 0
        %1435 = vmatprep.mubr.bf16.mxu0 0
        %1436 = vmatmul.mubr.bf16.gmra.mrb[0].mxu0 %v1401
        %v1437 = vpop.f32.mrb[0].mxu0
        %v1438 = vadd.f32 %v1371, %v1437
        %v1439 = vpop.f32.mrb[0].mxu0
        %v1440 = vpop.f32.mrb[0].mxu0
        %v1441 = vpop.f32.mrb[0].mxu0
        %1442 = vdwg.mxu0
        %v1447 = vunpack.c.l.b16 %v1348
        %v1448 = vunpack.c.l.b16 %v1349
        %v1449 = vunpack.c.l.b16 %v1350
        %v1450 = vunpack.c.l.b16 %v1351
        %v1451 = vpack.c.b16 %v1448, %v1447
        %v1452 = vpack.c.b16 %v1450, %v1449
        %1455 = vmatprep.subr.bf16.mxu0 0
        %1456 = vmatpush1.bf16.msra.mxu0 %v1451
        %1457 = vmatprep.subr.bf16.mxu0 0
        %1458 = vmatpush1.bf16.msra.mxu0 %v1452
        %1459 = vmatprep.subr.bf16.mxu0 0
        %1460 = vmatpush1.bf16.msra.mxu0 0
        %1461 = vmatprep.subr.bf16.mxu0 0
        %1462 = vmatpush1.bf16.msra.mxu0 0
        %1463 = vmatprep.subr.bf16.mxu0 0
        %1464 = vmatpush1.bf16.msra.mxu0 0
        %1465 = vmatprep.subr.bf16.mxu0 0
        %1466 = vmatpush1.bf16.msra.mxu0 0
        %1467 = vmatprep.subr.bf16.mxu0 0
        %1468 = vmatpush1.bf16.msra.mxu0 0
        %1469 = vmatprep.subr.bf16.mxu0 0
        %1470 = vmatpush1.bf16.msra.mxu0 0
        %1471 = vmatprep.subr.bf16.mxu0 0
        %1472 = vmatpush1.bf16.msra.mxu0 0
        %1473 = vmatprep.subr.bf16.mxu0 0
        %1474 = vmatpush1.bf16.msra.mxu0 0
        %1475 = vmatprep.subr.bf16.mxu0 0
        %1476 = vmatpush1.bf16.msra.mxu0 0
        %1477 = vmatprep.subr.bf16.mxu0 0
        %1478 = vmatpush1.bf16.msra.mxu0 0
        %1479 = vmatprep.subr.bf16.mxu0 0
        %1480 = vmatpush1.bf16.msra.mxu0 0
        %1481 = vmatprep.subr.bf16.mxu0 0
        %1482 = vmatpush1.bf16.msra.mxu0 0
        %1483 = vmatprep.subr.bf16.mxu0 0
        %1484 = vmatpush1.bf16.msra.mxu0 0
        %1485 = vmatprep.subr.bf16.mxu0 0
        %1486 = vmatpush1.bf16.msra.mxu0 0
        %1487 = vmatprep.mubr.bf16.mxu0 0
        %1488 = vmatmul.mubr.bf16.gmra.mrb[0].mxu0 %v1401
        %v1489 = vpop.f32.mrb[0].mxu0
        %v1490 = vadd.f32 %v1375, %v1489
        %v1491 = vpop.f32.mrb[0].mxu0
        %v1492 = vpop.f32.mrb[0].mxu0
        %v1493 = vpop.f32.mrb[0].mxu0
        %1494 = vdwg.mxu0
        %v1499 = vunpack.c.l.b16 %v1352
        %v1500 = vunpack.c.l.b16 %v1353
        %v1501 = vunpack.c.l.b16 %v1354
        %v1502 = vunpack.c.l.b16 %v1355
        %v1503 = vpack.c.b16 %v1500, %v1499
        %v1504 = vpack.c.b16 %v1502, %v1501
        %1507 = vmatprep.subr.bf16.mxu0 0
        %1508 = vmatpush1.bf16.msra.mxu0 %v1503
        %1509 = vmatprep.subr.bf16.mxu0 0
        %1510 = vmatpush1.bf16.msra.mxu0 %v1504
        %1511 = vmatprep.subr.bf16.mxu0 0
        %1512 = vmatpush1.bf16.msra.mxu0 0
        %1513 = vmatprep.subr.bf16.mxu0 0
        %1514 = vmatpush1.bf16.msra.mxu0 0
        %1515 = vmatprep.subr.bf16.mxu0 0
        %1516 = vmatpush1.bf16.msra.mxu0 0
        %1517 = vmatprep.subr.bf16.mxu0 0
        %1518 = vmatpush1.bf16.msra.mxu0 0
        %1519 = vmatprep.subr.bf16.mxu0 0
        %1520 = vmatpush1.bf16.msra.mxu0 0
        %1521 = vmatprep.subr.bf16.mxu0 0
        %1522 = vmatpush1.bf16.msra.mxu0 0
        %1523 = vmatprep.subr.bf16.mxu0 0
        %1524 = vmatpush1.bf16.msra.mxu0 0
        %1525 = vmatprep.subr.bf16.mxu0 0
        %1526 = vmatpush1.bf16.msra.mxu0 0
        %1527 = vmatprep.subr.bf16.mxu0 0
        %1528 = vmatpush1.bf16.msra.mxu0 0
        %1529 = vmatprep.subr.bf16.mxu0 0
        %1530 = vmatpush1.bf16.msra.mxu0 0
        %1531 = vmatprep.subr.bf16.mxu0 0
        %1532 = vmatpush1.bf16.msra.mxu0 0
        %1533 = vmatprep.subr.bf16.mxu0 0
        %1534 = vmatpush1.bf16.msra.mxu0 0
        %1535 = vmatprep.subr.bf16.mxu0 0
        %1536 = vmatpush1.bf16.msra.mxu0 0
        %1537 = vmatprep.subr.bf16.mxu0 0
        %1538 = vmatpush1.bf16.msra.mxu0 0
        %1539 = vmatprep.mubr.bf16.mxu0 0
        %1540 = vmatmul.mubr.bf16.gmra.mrb[0].mxu0 %v1401
        %v1541 = vpop.f32.mrb[0].mxu0
        %v1542 = vadd.f32 %v1379, %v1541
        %v1543 = vpop.f32.mrb[0].mxu0
        %v1544 = vpop.f32.mrb[0].mxu0
        %v1545 = vpop.f32.mrb[0].mxu0
        %1546 = vdwg.mxu0
        %v1551 = vunpack.c.l.b16 %v1356
        %v1552 = vunpack.c.l.b16 %v1357
        %v1553 = vunpack.c.l.b16 %v1358
        %v1554 = vunpack.c.l.b16 %v1359
        %v1555 = vpack.c.b16 %v1552, %v1551
        %v1556 = vpack.c.b16 %v1554, %v1553
        %1559 = vmatprep.subr.bf16.mxu0 0
        %1560 = vmatpush1.bf16.msra.mxu0 %v1555
        %1561 = vmatprep.subr.bf16.mxu0 0
        %1562 = vmatpush1.bf16.msra.mxu0 %v1556
        %1563 = vmatprep.subr.bf16.mxu0 0
        %1564 = vmatpush1.bf16.msra.mxu0 0
        %1565 = vmatprep.subr.bf16.mxu0 0
        %1566 = vmatpush1.bf16.msra.mxu0 0
        %1567 = vmatprep.subr.bf16.mxu0 0
        %1568 = vmatpush1.bf16.msra.mxu0 0
        %1569 = vmatprep.subr.bf16.mxu0 0
        %1570 = vmatpush1.bf16.msra.mxu0 0
        %1571 = vmatprep.subr.bf16.mxu0 0
        %1572 = vmatpush1.bf16.msra.mxu0 0
        %1573 = vmatprep.subr.bf16.mxu0 0
        %1574 = vmatpush1.bf16.msra.mxu0 0
        %1575 = vmatprep.subr.bf16.mxu0 0
        %1576 = vmatpush1.bf16.msra.mxu0 0
        %1577 = vmatprep.subr.bf16.mxu0 0
        %1578 = vmatpush1.bf16.msra.mxu0 0
        %1579 = vmatprep.subr.bf16.mxu0 0
        %1580 = vmatpush1.bf16.msra.mxu0 0
        %1581 = vmatprep.subr.bf16.mxu0 0
        %1582 = vmatpush1.bf16.msra.mxu0 0
        %1583 = vmatprep.subr.bf16.mxu0 0
        %1584 = vmatpush1.bf16.msra.mxu0 0
        %1585 = vmatprep.subr.bf16.mxu0 0
        %1586 = vmatpush1.bf16.msra.mxu0 0
        %1587 = vmatprep.subr.bf16.mxu0 0
        %1588 = vmatpush1.bf16.msra.mxu0 0
        %1589 = vmatprep.subr.bf16.mxu0 0
        %1590 = vmatpush1.bf16.msra.mxu0 0
        %1591 = vmatprep.mubr.bf16.mxu0 0
        %1592 = vmatmul.mubr.bf16.gmra.mrb[0].mxu0 %v1401
        %v1593 = vpop.f32.mrb[0].mxu0
        %v1594 = vadd.f32 %v1383, %v1593
        %v1595 = vpop.f32.mrb[0].mxu0
        %v1596 = vpop.f32.mrb[0].mxu0
        %v1597 = vpop.f32.mrb[0].mxu0
        %1598 = vdwg.mxu0
        %v1599 = vpack.c.bf16 %v1438, %v1438
        %v1600 = vpack.c.bf16 %v1490, %v1490
        %v1601 = vpack.c.bf16 %v1542, %v1542
        %v1602 = vpack.c.bf16 %v1594, %v1594
        %1604 = vrot.lane.b32.xlu0 %v1599, 120
        %v1605 = vpop.permute.xlu0 %1604
        %v1607 = vsel %vm1045, %v1599, 0
        %v1610 = vsel %vm1045, %v1605, 0
        %1612 = vmatprep.subr.bf16.mxu0 0
        %1613 = vmatpush1.bf16.xpose.msra.mxu0 %v1610
        %1614 = vmatprep.subr.bf16.mxu0 0
        %1615 = vmatpush1.bf16.xpose.msra.mxu0 0
        %1616 = vmatprep.subr.bf16.mxu0 0
        %1617 = vmatpush1.bf16.xpose.msra.mxu0 0
        %1618 = vmatprep.subr.bf16.mxu0 0
        %1619 = vmatpush1.bf16.xpose.msra.mxu0 0
        %1620 = vmatprep.subr.bf16.mxu0 0
        %1621 = vmatpush1.bf16.xpose.msra.mxu0 0
        %1622 = vmatprep.subr.bf16.mxu0 0
        %1623 = vmatpush1.bf16.xpose.msra.mxu0 0
        %1624 = vmatprep.subr.bf16.mxu0 0
        %1625 = vmatpush1.bf16.xpose.msra.mxu0 0
        %1626 = vmatprep.subr.bf16.mxu0 0
        %1627 = vmatpush1.bf16.xpose.msra.mxu0 0
        %1628 = vmatprep.subr.bf16.mxu0 0
        %1629 = vmatpush1.bf16.xpose.msra.mxu0 0
        %1630 = vmatprep.subr.bf16.mxu0 0
        %1631 = vmatpush1.bf16.xpose.msra.mxu0 0
        %1632 = vmatprep.subr.bf16.mxu0 0
        %1633 = vmatpush1.bf16.xpose.msra.mxu0 0
        %1634 = vmatprep.subr.bf16.mxu0 0
        %1635 = vmatpush1.bf16.xpose.msra.mxu0 0
        %1636 = vmatprep.subr.bf16.mxu0 0
        %1637 = vmatpush1.bf16.xpose.msra.mxu0 0
        %1638 = vmatprep.subr.bf16.mxu0 0
        %1639 = vmatpush1.bf16.xpose.msra.mxu0 0
        %1640 = vmatprep.subr.bf16.mxu0 0
        %1641 = vmatpush1.bf16.xpose.msra.mxu0 0
        %1642 = vmatprep.subr.bf16.mxu0 0
        %1643 = vmatpush1.bf16.xpose.msra.mxu0 0
        %1644 = vmatprep.mubr.bf16.mxu0 0
        %1645 = vmatmul.mubr.bf16.gmra.mrb[0].mxu0 %v1607
        %v1646 = vpop.f32.mrb[0].mxu0
        %v1647 = vadd.f32 0.0, %v1646
        %v1648 = vpop.f32.mrb[0].mxu0
        %v1649 = vpop.f32.mrb[0].mxu0
        %v1650 = vpop.f32.mrb[0].mxu0
        %1651 = vdwg.mxu0
        %1653 = vrot.lane.b32.xlu0 %v1600, 120
        %v1654 = vpop.permute.xlu0 %1653
        %v1656 = vsel %vm1045, %v1600, 0
        %v1659 = vsel %vm1045, %v1654, 0
        %1661 = vmatprep.subr.bf16.mxu0 0
        %1662 = vmatpush1.bf16.xpose.msra.mxu0 %v1659
        %1663 = vmatprep.subr.bf16.mxu0 0
        %1664 = vmatpush1.bf16.xpose.msra.mxu0 0
        %1665 = vmatprep.subr.bf16.mxu0 0
        %1666 = vmatpush1.bf16.xpose.msra.mxu0 0
        %1667 = vmatprep.subr.bf16.mxu0 0
        %1668 = vmatpush1.bf16.xpose.msra.mxu0 0
        %1669 = vmatprep.subr.bf16.mxu0 0
        %1670 = vmatpush1.bf16.xpose.msra.mxu0 0
        %1671 = vmatprep.subr.bf16.mxu0 0
        %1672 = vmatpush1.bf16.xpose.msra.mxu0 0
        %1673 = vmatprep.subr.bf16.mxu0 0
        %1674 = vmatpush1.bf16.xpose.msra.mxu0 0
        %1675 = vmatprep.subr.bf16.mxu0 0
        %1676 = vmatpush1.bf16.xpose.msra.mxu0 0
        %1677 = vmatprep.subr.bf16.mxu0 0
        %1678 = vmatpush1.bf16.xpose.msra.mxu0 0
        %1679 = vmatprep.subr.bf16.mxu0 0
        %1680 = vmatpush1.bf16.xpose.msra.mxu0 0
        %1681 = vmatprep.subr.bf16.mxu0 0
        %1682 = vmatpush1.bf16.xpose.msra.mxu0 0
        %1683 = vmatprep.subr.bf16.mxu0 0
        %1684 = vmatpush1.bf16.xpose.msra.mxu0 0
        %1685 = vmatprep.subr.bf16.mxu0 0
        %1686 = vmatpush1.bf16.xpose.msra.mxu0 0
        %1687 = vmatprep.subr.bf16.mxu0 0
        %1688 = vmatpush1.bf16.xpose.msra.mxu0 0
        %1689 = vmatprep.subr.bf16.mxu0 0
        %1690 = vmatpush1.bf16.xpose.msra.mxu0 0
        %1691 = vmatprep.subr.bf16.mxu0 0
        %1692 = vmatpush1.bf16.xpose.msra.mxu0 0
        %1693 = vmatprep.mubr.bf16.mxu0 0
        %1694 = vmatmul.mubr.bf16.gmra.mrb[0].mxu0 %v1656
        %v1695 = vpop.f32.mrb[0].mxu0
        %v1696 = vadd.f32 0.0, %v1695
        %v1697 = vpop.f32.mrb[0].mxu0
        %v1698 = vpop.f32.mrb[0].mxu0
        %v1699 = vpop.f32.mrb[0].mxu0
        %1700 = vdwg.mxu0
        %1702 = vrot.lane.b32.xlu0 %v1601, 120
        %v1703 = vpop.permute.xlu0 %1702
        %v1705 = vsel %vm1045, %v1601, 0
        %v1708 = vsel %vm1045, %v1703, 0
        %1710 = vmatprep.subr.bf16.mxu0 0
        %1711 = vmatpush1.bf16.xpose.msra.mxu0 %v1708
        %1712 = vmatprep.subr.bf16.mxu0 0
        %1713 = vmatpush1.bf16.xpose.msra.mxu0 0
        %1714 = vmatprep.subr.bf16.mxu0 0
        %1715 = vmatpush1.bf16.xpose.msra.mxu0 0
        %1716 = vmatprep.subr.bf16.mxu0 0
        %1717 = vmatpush1.bf16.xpose.msra.mxu0 0
        %1718 = vmatprep.subr.bf16.mxu0 0
        %1719 = vmatpush1.bf16.xpose.msra.mxu0 0
        %1720 = vmatprep.subr.bf16.mxu0 0
        %1721 = vmatpush1.bf16.xpose.msra.mxu0 0
        %1722 = vmatprep.subr.bf16.mxu0 0
        %1723 = vmatpush1.bf16.xpose.msra.mxu0 0
        %1724 = vmatprep.subr.bf16.mxu0 0
        %1725 = vmatpush1.bf16.xpose.msra.mxu0 0
        %1726 = vmatprep.subr.bf16.mxu0 0
        %1727 = vmatpush1.bf16.xpose.msra.mxu0 0
        %1728 = vmatprep.subr.bf16.mxu0 0
        %1729 = vmatpush1.bf16.xpose.msra.mxu0 0
        %1730 = vmatprep.subr.bf16.mxu0 0
        %1731 = vmatpush1.bf16.xpose.msra.mxu0 0
        %1732 = vmatprep.subr.bf16.mxu0 0
        %1733 = vmatpush1.bf16.xpose.msra.mxu0 0
        %1734 = vmatprep.subr.bf16.mxu0 0
        %1735 = vmatpush1.bf16.xpose.msra.mxu0 0
        %1736 = vmatprep.subr.bf16.mxu0 0
        %1737 = vmatpush1.bf16.xpose.msra.mxu0 0
        %1738 = vmatprep.subr.bf16.mxu0 0
        %1739 = vmatpush1.bf16.xpose.msra.mxu0 0
        %1740 = vmatprep.subr.bf16.mxu0 0
        %1741 = vmatpush1.bf16.xpose.msra.mxu0 0
        %1742 = vmatprep.mubr.bf16.mxu0 0
        %1743 = vmatmul.mubr.bf16.gmra.mrb[0].mxu0 %v1705
        %v1744 = vpop.f32.mrb[0].mxu0
        %v1745 = vadd.f32 0.0, %v1744
        %v1746 = vpop.f32.mrb[0].mxu0
        %v1747 = vpop.f32.mrb[0].mxu0
        %v1748 = vpop.f32.mrb[0].mxu0
        %1749 = vdwg.mxu0
        %1751 = vrot.lane.b32.xlu0 %v1602, 120
        %v1752 = vpop.permute.xlu0 %1751
        %v1754 = vsel %vm1045, %v1602, 0
        %v1757 = vsel %vm1045, %v1752, 0
        %1759 = vmatprep.subr.bf16.mxu0 0
        %1760 = vmatpush1.bf16.xpose.msra.mxu0 %v1757
        %1761 = vmatprep.subr.bf16.mxu0 0
        %1762 = vmatpush1.bf16.xpose.msra.mxu0 0
        %1763 = vmatprep.subr.bf16.mxu0 0
        %1764 = vmatpush1.bf16.xpose.msra.mxu0 0
        %1765 = vmatprep.subr.bf16.mxu0 0
        %1766 = vmatpush1.bf16.xpose.msra.mxu0 0
        %1767 = vmatprep.subr.bf16.mxu0 0
        %1768 = vmatpush1.bf16.xpose.msra.mxu0 0
        %1769 = vmatprep.subr.bf16.mxu0 0
        %1770 = vmatpush1.bf16.xpose.msra.mxu0 0
        %1771 = vmatprep.subr.bf16.mxu0 0
        %1772 = vmatpush1.bf16.xpose.msra.mxu0 0
        %1773 = vmatprep.subr.bf16.mxu0 0
        %1774 = vmatpush1.bf16.xpose.msra.mxu0 0
        %1775 = vmatprep.subr.bf16.mxu0 0
        %1776 = vmatpush1.bf16.xpose.msra.mxu0 0
        %1777 = vmatprep.subr.bf16.mxu0 0
        %1778 = vmatpush1.bf16.xpose.msra.mxu0 0
        %1779 = vmatprep.subr.bf16.mxu0 0
        %1780 = vmatpush1.bf16.xpose.msra.mxu0 0
        %1781 = vmatprep.subr.bf16.mxu0 0
        %1782 = vmatpush1.bf16.xpose.msra.mxu0 0
        %1783 = vmatprep.subr.bf16.mxu0 0
        %1784 = vmatpush1.bf16.xpose.msra.mxu0 0
        %1785 = vmatprep.subr.bf16.mxu0 0
        %1786 = vmatpush1.bf16.xpose.msra.mxu0 0
        %1787 = vmatprep.subr.bf16.mxu0 0
        %1788 = vmatpush1.bf16.xpose.msra.mxu0 0
        %1789 = vmatprep.subr.bf16.mxu0 0
        %1790 = vmatpush1.bf16.xpose.msra.mxu0 0
        %1791 = vmatprep.mubr.bf16.mxu0 0
        %1792 = vmatmul.mubr.bf16.gmra.mrb[0].mxu0 %v1754
        %v1793 = vpop.f32.mrb[0].mxu0
        %v1794 = vadd.f32 0.0, %v1793
        %v1795 = vpop.f32.mrb[0].mxu0
        %v1796 = vpop.f32.mrb[0].mxu0
        %v1797 = vpop.f32.mrb[0].mxu0
        %1798 = vdwg.mxu0
        %v1799 = vsel %vm1045, %v1647, -inf
        %1800 = vmax.xlane.f32.xlu0 %v1799
        %v1801 = vpop.xlane.xlu0 %1800
        %v1802 = vsel %vm1045, %v1696, -inf
        %1803 = vmax.xlane.f32.xlu0 %v1802
        %v1804 = vpop.xlane.xlu0 %1803
        %v1805 = vsel %vm1045, %v1745, -inf
        %1806 = vmax.xlane.f32.xlu0 %v1805
        %v1807 = vpop.xlane.xlu0 %1806
        %v1808 = vsel %vm1045, %v1794, -inf
        %1809 = vmax.xlane.f32.xlu0 %v1808
        %v1810 = vpop.xlane.xlu0 %1809
        %v1811 = vsub.f32 %v1647, %v1801
        %v1812 = vsub.f32 %v1696, %v1804
        %v1813 = vsub.f32 %v1745, %v1807
        %v1814 = vsub.f32 %v1794, %v1810
        %v1815 = vmul.f32 %v1811, 1.442695
        %v1816 = vpow.pop %v1815
        %v1817 = vmul.f32 %v1812, 1.442695
        %v1818 = vpow.pop %v1817
        %v1819 = vmul.f32 %v1813, 1.442695
        %v1820 = vpow.pop %v1819
        %v1821 = vmul.f32 %v1814, 1.442695
        %v1822 = vpow.pop %v1821
        %v1823 = vsel %vm1045, %v1816, 0.0
        %1824 = vadd.xlane.f32.xlu0 %v1823
        %v1825 = vpop.xlane.xlu0 %1824
        %v1826 = vsel %vm1045, %v1818, 0.0
        %1827 = vadd.xlane.f32.xlu0 %v1826
        %v1828 = vpop.xlane.xlu0 %1827
        %v1829 = vsel %vm1045, %v1820, 0.0
        %1830 = vadd.xlane.f32.xlu0 %v1829
        %v1831 = vpop.xlane.xlu0 %1830
        %v1832 = vsel %vm1045, %v1822, 0.0
        %1833 = vadd.xlane.f32.xlu0 %v1832
        %v1834 = vpop.xlane.xlu0 %1833
        %v1835 = vrcp.pop %v1825
        %v1836 = vrcp.pop %v1828
        %v1837 = vrcp.pop %v1831
        %v1838 = vrcp.pop %v1834
        %v1839 = vmul.f32 %v1816, %v1835
        %v1840 = vmul.f32 %v1818, %v1836
        %v1841 = vmul.f32 %v1820, %v1837
        %v1842 = vmul.f32 %v1822, %v1838
        %v1843 = vpack.c.bf16 %v1839, %v1839
        %v1844 = vpack.c.bf16 %v1840, %v1840
        %v1845 = vpack.c.bf16 %v1841, %v1841
        %v1846 = vpack.c.bf16 %v1842, %v1842
        %1847 = vrot.lane.b32.xlu0 %v1599, 112
        %v1848 = vpop.permute.xlu0 %1847
        %v1850 = vsel %vm1045, %v1843, 0
        %vm1852 = vcmask 1043456
        %v1854 = vsel %vm1852, %v1848, 0
        %1856 = vmatprep.subr.bf16.mxu0 0
        %1857 = vmatpush1.bf16.msra.mxu0 %v1854
        %1858 = vmatprep.subr.bf16.mxu0 0
        %1859 = vmatpush1.bf16.msra.mxu0 0
        %1860 = vmatprep.subr.bf16.mxu0 0
        %1861 = vmatpush1.bf16.msra.mxu0 0
        %1862 = vmatprep.subr.bf16.mxu0 0
        %1863 = vmatpush1.bf16.msra.mxu0 0
        %1864 = vmatprep.subr.bf16.mxu0 0
        %1865 = vmatpush1.bf16.msra.mxu0 0
        %1866 = vmatprep.subr.bf16.mxu0 0
        %1867 = vmatpush1.bf16.msra.mxu0 0
        %1868 = vmatprep.subr.bf16.mxu0 0
        %1869 = vmatpush1.bf16.msra.mxu0 0
        %1870 = vmatprep.subr.bf16.mxu0 0
        %1871 = vmatpush1.bf16.msra.mxu0 0
        %1872 = vmatprep.subr.bf16.mxu0 0
        %1873 = vmatpush1.bf16.msra.mxu0 0
        %1874 = vmatprep.subr.bf16.mxu0 0
        %1875 = vmatpush1.bf16.msra.mxu0 0
        %1876 = vmatprep.subr.bf16.mxu0 0
        %1877 = vmatpush1.bf16.msra.mxu0 0
        %1878 = vmatprep.subr.bf16.mxu0 0
        %1879 = vmatpush1.bf16.msra.mxu0 0
        %1880 = vmatprep.subr.bf16.mxu0 0
        %1881 = vmatpush1.bf16.msra.mxu0 0
        %1882 = vmatprep.subr.bf16.mxu0 0
        %1883 = vmatpush1.bf16.msra.mxu0 0
        %1884 = vmatprep.subr.bf16.mxu0 0
        %1885 = vmatpush1.bf16.msra.mxu0 0
        %1886 = vmatprep.subr.bf16.mxu0 0
        %1887 = vmatpush1.bf16.msra.mxu0 0
        %1888 = vmatprep.mubr.bf16.mxu0 0
        %1889 = vmatmul.mubr.bf16.gmra.mrb[0].mxu0 %v1850
        %v1890 = vpop.f32.mrb[0].mxu0
        %v1891 = vadd.f32 0.0, %v1890
        %v1892 = vpop.f32.mrb[0].mxu0
        %v1893 = vpop.f32.mrb[0].mxu0
        %v1894 = vpop.f32.mrb[0].mxu0
        %1895 = vdwg.mxu0
        %1896 = vrot.lane.b32.xlu0 %v1600, 112
        %v1897 = vpop.permute.xlu0 %1896
        %v1899 = vsel %vm1045, %v1844, 0
        %v1902 = vsel %vm1852, %v1897, 0
        %1904 = vmatprep.subr.bf16.mxu0 0
        %1905 = vmatpush1.bf16.msra.mxu0 %v1902
        %1906 = vmatprep.subr.bf16.mxu0 0
        %1907 = vmatpush1.bf16.msra.mxu0 0
        %1908 = vmatprep.subr.bf16.mxu0 0
        %1909 = vmatpush1.bf16.msra.mxu0 0
        %1910 = vmatprep.subr.bf16.mxu0 0
        %1911 = vmatpush1.bf16.msra.mxu0 0
        %1912 = vmatprep.subr.bf16.mxu0 0
        %1913 = vmatpush1.bf16.msra.mxu0 0
        %1914 = vmatprep.subr.bf16.mxu0 0
        %1915 = vmatpush1.bf16.msra.mxu0 0
        %1916 = vmatprep.subr.bf16.mxu0 0
        %1917 = vmatpush1.bf16.msra.mxu0 0
        %1918 = vmatprep.subr.bf16.mxu0 0
        %1919 = vmatpush1.bf16.msra.mxu0 0
        %1920 = vmatprep.subr.bf16.mxu0 0
        %1921 = vmatpush1.bf16.msra.mxu0 0
        %1922 = vmatprep.subr.bf16.mxu0 0
        %1923 = vmatpush1.bf16.msra.mxu0 0
        %1924 = vmatprep.subr.bf16.mxu0 0
        %1925 = vmatpush1.bf16.msra.mxu0 0
        %1926 = vmatprep.subr.bf16.mxu0 0
        %1927 = vmatpush1.bf16.msra.mxu0 0
        %1928 = vmatprep.subr.bf16.mxu0 0
        %1929 = vmatpush1.bf16.msra.mxu0 0
        %1930 = vmatprep.subr.bf16.mxu0 0
        %1931 = vmatpush1.bf16.msra.mxu0 0
        %1932 = vmatprep.subr.bf16.mxu0 0
        %1933 = vmatpush1.bf16.msra.mxu0 0
        %1934 = vmatprep.subr.bf16.mxu0 0
        %1935 = vmatpush1.bf16.msra.mxu0 0
        %1936 = vmatprep.mubr.bf16.mxu0 0
        %1937 = vmatmul.mubr.bf16.gmra.mrb[0].mxu0 %v1899
        %v1938 = vpop.f32.mrb[0].mxu0
        %v1939 = vadd.f32 0.0, %v1938
        %v1940 = vpop.f32.mrb[0].mxu0
        %v1941 = vpop.f32.mrb[0].mxu0
        %v1942 = vpop.f32.mrb[0].mxu0
        %1943 = vdwg.mxu0
        %1944 = vrot.lane.b32.xlu0 %v1601, 112
        %v1945 = vpop.permute.xlu0 %1944
        %v1947 = vsel %vm1045, %v1845, 0
        %v1950 = vsel %vm1852, %v1945, 0
        %1952 = vmatprep.subr.bf16.mxu0 0
        %1953 = vmatpush1.bf16.msra.mxu0 %v1950
        %1954 = vmatprep.subr.bf16.mxu0 0
        %1955 = vmatpush1.bf16.msra.mxu0 0
        %1956 = vmatprep.subr.bf16.mxu0 0
        %1957 = vmatpush1.bf16.msra.mxu0 0
        %1958 = vmatprep.subr.bf16.mxu0 0
        %1959 = vmatpush1.bf16.msra.mxu0 0
        %1960 = vmatprep.subr.bf16.mxu0 0
        %1961 = vmatpush1.bf16.msra.mxu0 0
        %1962 = vmatprep.subr.bf16.mxu0 0
        %1963 = vmatpush1.bf16.msra.mxu0 0
        %1964 = vmatprep.subr.bf16.mxu0 0
        %1965 = vmatpush1.bf16.msra.mxu0 0
        %1966 = vmatprep.subr.bf16.mxu0 0
        %1967 = vmatpush1.bf16.msra.mxu0 0
        %1968 = vmatprep.subr.bf16.mxu0 0
        %1969 = vmatpush1.bf16.msra.mxu0 0
        %1970 = vmatprep.subr.bf16.mxu0 0
        %1971 = vmatpush1.bf16.msra.mxu0 0
        %1972 = vmatprep.subr.bf16.mxu0 0
        %1973 = vmatpush1.bf16.msra.mxu0 0
        %1974 = vmatprep.subr.bf16.mxu0 0
        %1975 = vmatpush1.bf16.msra.mxu0 0
        %1976 = vmatprep.subr.bf16.mxu0 0
        %1977 = vmatpush1.bf16.msra.mxu0 0
        %1978 = vmatprep.subr.bf16.mxu0 0
        %1979 = vmatpush1.bf16.msra.mxu0 0
        %1980 = vmatprep.subr.bf16.mxu0 0
        %1981 = vmatpush1.bf16.msra.mxu0 0
        %1982 = vmatprep.subr.bf16.mxu0 0
        %1983 = vmatpush1.bf16.msra.mxu0 0
        %1984 = vmatprep.mubr.bf16.mxu0 0
        %1985 = vmatmul.mubr.bf16.gmra.mrb[0].mxu0 %v1947
        %v1986 = vpop.f32.mrb[0].mxu0
        %v1987 = vadd.f32 0.0, %v1986
        %v1988 = vpop.f32.mrb[0].mxu0
        %v1989 = vpop.f32.mrb[0].mxu0
        %v1990 = vpop.f32.mrb[0].mxu0
        %1991 = vdwg.mxu0
        %1992 = vrot.lane.b32.xlu0 %v1602, 112
        %v1993 = vpop.permute.xlu0 %1992
        %v1995 = vsel %vm1045, %v1846, 0
        %v1998 = vsel %vm1852, %v1993, 0
        %2000 = vmatprep.subr.bf16.mxu0 0
        %2001 = vmatpush1.bf16.msra.mxu0 %v1998
        %2002 = vmatprep.subr.bf16.mxu0 0
        %2003 = vmatpush1.bf16.msra.mxu0 0
        %2004 = vmatprep.subr.bf16.mxu0 0
        %2005 = vmatpush1.bf16.msra.mxu0 0
        %2006 = vmatprep.subr.bf16.mxu0 0
        %2007 = vmatpush1.bf16.msra.mxu0 0
        %2008 = vmatprep.subr.bf16.mxu0 0
        %2009 = vmatpush1.bf16.msra.mxu0 0
        %2010 = vmatprep.subr.bf16.mxu0 0
        %2011 = vmatpush1.bf16.msra.mxu0 0
        %2012 = vmatprep.subr.bf16.mxu0 0
        %2013 = vmatpush1.bf16.msra.mxu0 0
        %2014 = vmatprep.subr.bf16.mxu0 0
        %2015 = vmatpush1.bf16.msra.mxu0 0
        %2016 = vmatprep.subr.bf16.mxu0 0
        %2017 = vmatpush1.bf16.msra.mxu0 0
        %2018 = vmatprep.subr.bf16.mxu0 0
        %2019 = vmatpush1.bf16.msra.mxu0 0
        %2020 = vmatprep.subr.bf16.mxu0 0
        %2021 = vmatpush1.bf16.msra.mxu0 0
        %2022 = vmatprep.subr.bf16.mxu0 0
        %2023 = vmatpush1.bf16.msra.mxu0 0
        %2024 = vmatprep.subr.bf16.mxu0 0
        %2025 = vmatpush1.bf16.msra.mxu0 0
        %2026 = vmatprep.subr.bf16.mxu0 0
        %2027 = vmatpush1.bf16.msra.mxu0 0
        %2028 = vmatprep.subr.bf16.mxu0 0
        %2029 = vmatpush1.bf16.msra.mxu0 0
        %2030 = vmatprep.subr.bf16.mxu0 0
        %2031 = vmatpush1.bf16.msra.mxu0 0
        %2032 = vmatprep.mubr.bf16.mxu0 0
        %2033 = vmatmul.mubr.bf16.gmra.mrb[0].mxu0 %v1995
        %v2034 = vpop.f32.mrb[0].mxu0
        %v2035 = vadd.f32 0.0, %v2034
        %v2036 = vpop.f32.mrb[0].mxu0
        %v2037 = vpop.f32.mrb[0].mxu0
        %v2038 = vpop.f32.mrb[0].mxu0
        %2039 = vdwg.mxu0
        %v2040 = vsel %vm1229, %v1891, 0.0
        %v2041 = vsel %vm1229, %v1939, 0.0
        %v2042 = vadd.f32 %v2040, %v2041
        %v2043 = vsel %vm1229, %v1987, 0.0
        %v2044 = vadd.f32 %v2042, %v2043
        %v2045 = vsel %vm1229, %v2035, 0.0
        %v2046 = vadd.f32 %v2044, %v2045
        %v2047 = vld [vmem:[%s770] sm:$0x1]
        %v2049 = vlaneseq
        %v2050 = vshrl.u32 %v2049, 7
        %v2051 = vsub.s32 0, %v2050
        %v2052 = vrot.slane %v2047, %v2051
        %v2054 = vadd.f32 %v2046, %v2052
        %v2055 = vadd.f32 %v2054, %v1040
        %v2056 = vmul.f32 %v2055, 0.999995
        %v2057 = vadd.f32 %v1342, %v2056
        %v2058 = vpack.c.bf16 %v2057, %v2057
        %v2059 = vld [vmem:[%s779] sm:$0xf]
        %v2060 = vld [vmem:[%s779 + $0x4] sm:$0xf]
        %v2061 = vld [vmem:[%s779 + $0x8] sm:$0xf]
        %v2062 = vld [vmem:[%s779 + $0xc] sm:$0xf]
        %v2063 = vld [vmem:[%s787] sm:$0x1]
        %v2065 = vlaneseq
        %v2066 = vshrl.u32 %v2065, 7
        %v2067 = vsub.s32 0, %v2066
        %v2068 = vrot.slane %v2063, %v2067
        %v2074 = vunpack.c.l.b16 %v2059
        %v2075 = vunpack.c.l.b16 %v2060
        %v2076 = vunpack.c.l.b16 %v2061
        %v2077 = vunpack.c.l.b16 %v2062
        %v2078 = vpack.c.b16 %v2075, %v2074
        %v2079 = vpack.c.b16 %v2077, %v2076
        %v2083 = vsel %vm1229, %v2058, 0
        %2085 = vmatprep.subr.bf16.mxu0 0
        %2086 = vmatpush1.bf16.msra.mxu0 %v2078
        %2087 = vmatprep.subr.bf16.mxu0 0
        %2088 = vmatpush1.bf16.msra.mxu0 %v2079
        %2089 = vmatprep.subr.bf16.mxu0 0
        %2090 = vmatpush1.bf16.msra.mxu0 0
        %2091 = vmatprep.subr.bf16.mxu0 0
        %2092 = vmatpush1.bf16.msra.mxu0 0
        %2093 = vmatprep.subr.bf16.mxu0 0
        %2094 = vmatpush1.bf16.msra.mxu0 0
        %2095 = vmatprep.subr.bf16.mxu0 0
        %2096 = vmatpush1.bf16.msra.mxu0 0
        %2097 = vmatprep.subr.bf16.mxu0 0
        %2098 = vmatpush1.bf16.msra.mxu0 0
        %2099 = vmatprep.subr.bf16.mxu0 0
        %2100 = vmatpush1.bf16.msra.mxu0 0
        %2101 = vmatprep.subr.bf16.mxu0 0
        %2102 = vmatpush1.bf16.msra.mxu0 0
        %2103 = vmatprep.subr.bf16.mxu0 0
        %2104 = vmatpush1.bf16.msra.mxu0 0
        %2105 = vmatprep.subr.bf16.mxu0 0
        %2106 = vmatpush1.bf16.msra.mxu0 0
        %2107 = vmatprep.subr.bf16.mxu0 0
        %2108 = vmatpush1.bf16.msra.mxu0 0
        %2109 = vmatprep.subr.bf16.mxu0 0
        %2110 = vmatpush1.bf16.msra.mxu0 0
        %2111 = vmatprep.subr.bf16.mxu0 0
        %2112 = vmatpush1.bf16.msra.mxu0 0
        %2113 = vmatprep.subr.bf16.mxu0 0
        %2114 = vmatpush1.bf16.msra.mxu0 0
        %2115 = vmatprep.subr.bf16.mxu0 0
        %2116 = vmatpush1.bf16.msra.mxu0 0
        %2117 = vmatprep.mubr.bf16.mxu0 0
        %2118 = vmatmul.mubr.bf16.gmra.mrb[0].mxu0 %v2083
        %v2119 = vpop.f32.mrb[0].mxu0
        %v2120 = vadd.f32 %v2068, %v2119
        %v2121 = vpop.f32.mrb[0].mxu0
        %v2122 = vpop.f32.mrb[0].mxu0
        %v2123 = vpop.f32.mrb[0].mxu0
        %2124 = vdwg.mxu0
        %v2125 = vmax.f32 %v2120, 0.0
        %v2126 = vpack.c.bf16 %v2125, %v2125
        %v2127 = vld [vmem:[%s911] sm:$0xf]
        %v2128 = vld [vmem:[%s911 + $0x4] sm:$0xf]
        %v2129 = vld [vmem:[%s911 + $0x8] sm:$0xf]
        %v2130 = vld [vmem:[%s911 + $0xc] sm:$0xf]
        %v2131 = vld [vmem:[%s911 + $0x10] sm:$0xf]
        %v2132 = vld [vmem:[%s911 + $0x14] sm:$0xf]
        %v2133 = vld [vmem:[%s911 + $0x18] sm:$0xf]
        %v2134 = vld [vmem:[%s911 + $0x1c] sm:$0xf]
        %v2135 = vld [vmem:[%s795] sm:$0x1]
        %v2137 = vlaneseq
        %v2138 = vshrl.u32 %v2137, 7
        %v2139 = vsub.s32 0, %v2138
        %v2140 = vrot.slane %v2135, %v2139
        %v2150 = vunpack.c.l.b16 %v2127
        %v2151 = vunpack.c.l.b16 %v2128
        %v2152 = vunpack.c.l.b16 %v2129
        %v2153 = vunpack.c.l.b16 %v2130
        %v2154 = vunpack.c.l.b16 %v2131
        %v2155 = vunpack.c.l.b16 %v2132
        %v2156 = vunpack.c.l.b16 %v2133
        %v2157 = vunpack.c.l.b16 %v2134
        %v2158 = vpack.c.b16 %v2151, %v2150
        %v2159 = vpack.c.b16 %v2153, %v2152
        %v2160 = vpack.c.b16 %v2155, %v2154
        %v2161 = vpack.c.b16 %v2157, %v2156
        %vm2166 = vcmask 523264
        %v2168 = vsel %vm2166, %v2126, 0
        %2170 = vmatprep.subr.bf16.mxu0 0
        %2171 = vmatpush1.bf16.msra.mxu0 %v2158
        %2172 = vmatprep.subr.bf16.mxu0 0
        %2173 = vmatpush1.bf16.msra.mxu0 %v2159
        %2174 = vmatprep.subr.bf16.mxu0 0
        %2175 = vmatpush1.bf16.msra.mxu0 %v2160
        %2176 = vmatprep.subr.bf16.mxu0 0
        %2177 = vmatpush1.bf16.msra.mxu0 %v2161
        %2178 = vmatprep.subr.bf16.mxu0 0
        %2179 = vmatpush1.bf16.msra.mxu0 0
        %2180 = vmatprep.subr.bf16.mxu0 0
        %2181 = vmatpush1.bf16.msra.mxu0 0
        %2182 = vmatprep.subr.bf16.mxu0 0
        %2183 = vmatpush1.bf16.msra.mxu0 0
        %2184 = vmatprep.subr.bf16.mxu0 0
        %2185 = vmatpush1.bf16.msra.mxu0 0
        %2186 = vmatprep.subr.bf16.mxu0 0
        %2187 = vmatpush1.bf16.msra.mxu0 0
        %2188 = vmatprep.subr.bf16.mxu0 0
        %2189 = vmatpush1.bf16.msra.mxu0 0
        %2190 = vmatprep.subr.bf16.mxu0 0
        %2191 = vmatpush1.bf16.msra.mxu0 0
        %2192 = vmatprep.subr.bf16.mxu0 0
        %2193 = vmatpush1.bf16.msra.mxu0 0
        %2194 = vmatprep.subr.bf16.mxu0 0
        %2195 = vmatpush1.bf16.msra.mxu0 0
        %2196 = vmatprep.subr.bf16.mxu0 0
        %2197 = vmatpush1.bf16.msra.mxu0 0
        %2198 = vmatprep.subr.bf16.mxu0 0
        %2199 = vmatpush1.bf16.msra.mxu0 0
        %2200 = vmatprep.subr.bf16.mxu0 0
        %2201 = vmatpush1.bf16.msra.mxu0 0
        %2202 = vmatprep.mubr.bf16.mxu0 0
        %2203 = vmatmul.mubr.bf16.gmra.mrb[0].mxu0 %v2168
        %v2204 = vpop.f32.mrb[0].mxu0
        %v2205 = vadd.f32 %v2140, %v2204
        %v2206 = vpop.f32.mrb[0].mxu0
        %v2207 = vpop.f32.mrb[0].mxu0
        %v2208 = vpop.f32.mrb[0].mxu0
        %2209 = vdwg.mxu0
        %v2210 = vadd.f32 %v2057, %v2205
        %v2211 = vmul.f32 %v2210, 0.999995
        %2212 = vst.msk [vmem:[#allocation19] sm:$0xff] %vm1229, %v2211
        // Predicated region
        $region141: #{graphgps_forward.1} parent=95 // pred_check
          %p2213 = pneg %p501
        $region142: #{graphgps_forward.1} parent=95 // pred_check_branch
          %2215 = sbr.rel (%p2213) target = $region144
        $region143: #{graphgps_forward.1} parent=95 // pred_region
          %s2217 = ssub.s32 128, 128
          %2218 = vsyncadd [#allocation7], %s2217
          %s2220 = sshll.u32 [#allocation19], 4
          %s2221 = int_to_ptr.vmem [resolvable:$true] %s2220
          %2223 = dma.vmem_to_hbm [thread:$0]  %s2221, 128, %s19, [#allocation7]
        $region144: #{graphgps_forward.1} parent=95 // pred_fallthru
          _
        // Predicated region
        $region145: #{graphgps_forward.1} parent=95 // pred_check
          %p2224 = pneg %p501
        $region146: #{graphgps_forward.1} parent=95 // pred_check_branch
          %2226 = sbr.rel (%p2224) target = $region148
        $region147: #{graphgps_forward.1} parent=95 // pred_region
          %2227 = dma.done [#allocation7], 128
        $region148: #{graphgps_forward.1} parent=95 // pred_fallthru
          _
      $region96: #{graphgps_forward.1} parent=5 // pred_fallthru
        _
      %p2228 = scmp.le.s32.totalorder 2, %s29
      // Predicated region
      $region149: #{graphgps_forward.1} parent=5 // pred_check
        %p2229 = pneg %p2228
      $region150: #{graphgps_forward.1} parent=5 // pred_check_branch
        %2231 = sbr.rel (%p2229) target = $region152
      $region151: #{graphgps_forward.1} parent=5 // pred_region
        %s2232 = ssub.s32 %s29, 2
      $region152: #{graphgps_forward.1} parent=5 // pred_fallthru
        _
    $region6: #{graphgps_forward.1} parent=1 // loop_footer
      %s33 = sadd.s32 1, %s29
    $region7: #{graphgps_forward.1} parent=1 // loop_footer_branch
      %28 = sbr.rel target = $region3
    $region8: #{graphgps_forward.1} parent=1 // loop_exit
      _
    %2233 = vsyncpa [#allocation6], 1
    %s2234 = scalar_lea.sflag [#allocation6], 1
    %2235 = vsyncpa %s2234, 1
    %2236 = vsyncpa [#allocation9], 1
    %2237 = vsyncpa [#allocation12], 1
    %2238 = vsyncpa [#allocation7], 1
    %s2239 = scalar_lea.sflag [#allocation7], 1
    %2240 = vsyncpa %s2239, 1

</llo_original>
